<compile_context>
chip_gen: v7x
topology: tpu7x:2x2x1
jax: 0.10.0
libtpu: 0.0.40
codegen_flags: <defaults>
</compile_context>

<pallas_src>
import functools

import numpy as np
import jax
import jax.numpy as jnp
from jax.experimental import pallas as pl
from jax.experimental.pallas import tpu as pltpu

partial = functools.partial

# ----------------------------------------------------------------------------
# EfficientNet-B4 architecture constants (width 1.4, depth 1.8)
# ----------------------------------------------------------------------------
STEM_CH = 48
HEAD_CH = 1792  # == num_ftrs of efficientnet_b4 classifier[-1]
LANE = 128

# (expand_ratio, kernel, stride, out_ch, repeats) per stage
STAGES = [
    (1, 3, 1, 24, 2),
    (6, 3, 2, 32, 4),
    (6, 5, 2, 56, 4),
    (6, 3, 2, 112, 6),
    (6, 5, 1, 160, 6),
    (6, 5, 2, 272, 8),
    (6, 3, 1, 448, 2),
]


def _build_block_cfgs():
    cfgs = []
    cin = STEM_CH
    for expand, k, stride, cout, repeats in STAGES:
        for r in range(repeats):
            cfgs.append((expand, k, stride if r == 0 else 1, cin, cout))
            cin = cout
    return tuple(cfgs)


BLOCK_CFGS = _build_block_cfgs()


def _rup(n, q=LANE):
    return ((n + q - 1) // q) * q


def _pick_tile(dim, pref, quantum):
    """Largest tile <= pref that divides dim and is a multiple of quantum,
    falling back to the full dim (always a legal Pallas block)."""
    if dim <= pref:
        return dim
    t = (pref // quantum) * quantum
    while t >= quantum:
        if dim % t == 0:
            return t
        t -= quantum
    return dim


_VMEM = pl.BlockSpec(memory_space=pltpu.MemorySpace.VMEM)

# ----------------------------------------------------------------------------
# Kernels
# ----------------------------------------------------------------------------
def _mm_kernel(*refs, act, has_gate, has_res):
    """Fused GEMM: (1,tm,tk)x(tk,tn) -> f32 acc; epilogue = BN scale/bias,
    optional SiLU, optional residual add; optional per-(batch, K-chan) gate on
    the A tile (SE excitation)."""
    it = iter(refs)
    a_ref = next(it)
    w_ref = next(it)
    s_ref = next(it)
    b_ref = next(it)
    g_ref = next(it) if has_gate else None
    r_ref = next(it) if has_res else None
    o_ref = next(it)
    acc_ref = next(it)

    k = pl.program_id(3)

    @pl.when(k == 0)
    def _():
        acc_ref[...] = jnp.zeros_like(acc_ref)

    a = a_ref[0]                       # (tm, tk) bf16
    if has_gate:
        a = a * g_ref[0]               # (1, tk) gate broadcast over rows
    acc_ref[...] += jnp.dot(a, w_ref[...], preferred_element_type=jnp.float32)

    @pl.when(k == pl.num_programs(3) - 1)
    def _():
        y = acc_ref[...] * s_ref[...] + b_ref[...]
        if act == "silu":
            y = y * jax.nn.sigmoid(y)
        if has_res:
            y = y + r_ref[0].astype(jnp.float32)
        o_ref[0] = y.astype(o_ref.dtype)


def _dw_kernel(x_ref, w_ref, s_ref, b_ref, o_ref, *, k, H, W):
    """Depthwise kxk conv (stride 1, 'same') + folded BN + SiLU for one
    (batch, 128-channel) tile.  Taps are in-VMEM shifted slices (no im2col)."""
    x = x_ref[0].astype(jnp.float32)           # (Hp, Wp, ct)
    w = w_ref[...].astype(jnp.float32)         # (k*k, ct)
    ct = x.shape[-1]
    acc = jnp.zeros((H, W, ct), jnp.float32)
    for dy in range(k):
        for dx in range(k):
            t = dy * k + dx
            tap = x[dy:dy + H, dx:dx + W, :]
            acc = acc + tap * w[t:t + 1, :]
    y = acc * s_ref[...] + b_ref[...]
    y = y * jax.nn.sigmoid(y)
    o_ref[0] = y.astype(o_ref.dtype)


def _pool_kernel(x_ref, o_ref, *, inv_hw):
    """HW-gridded global average pool accumulator: (B, hw_tile, C) -> (B, C)."""
    @pl.when(pl.program_id(0) == 0)
    def _():
        o_ref[...] = jnp.zeros_like(o_ref)

    o_ref[...] += jnp.sum(x_ref[...].astype(jnp.float32), axis=1) * inv_hw


def _se_fc_kernel(p_ref, w1_ref, b1_ref, w2_ref, b2_ref, g_ref):
    """SE excitation on the pooled (B, C) vector: FC -> SiLU -> FC -> sigmoid."""
    p = p_ref[...].astype(jnp.bfloat16)                        # (B, C)
    h = jnp.dot(p, w1_ref[...], preferred_element_type=jnp.float32) + b1_ref[...]
    h = h * jax.nn.sigmoid(h)                                  # SiLU (f32)
    g = jnp.dot(h.astype(jnp.bfloat16), w2_ref[...],
                preferred_element_type=jnp.float32) + b2_ref[...]
    g_ref[...] = jax.nn.sigmoid(g).astype(g_ref.dtype)         # gate (B, C)


def _head_pool_kernel(a_ref, w_ref, s_ref, b_ref, o_ref, acc_ref, pool_ref, *,
                      inv_hw):
    """Head 1x1 conv + BN + SiLU fused with the global average pool.
    grid = (B, Nt, Mt, Kt); pooled result accumulated in a (1, tn) scratch."""
    m = pl.program_id(2)
    k = pl.program_id(3)
    nm = pl.num_programs(2)
    nk = pl.num_programs(3)

    @pl.when((m == 0) & (k == 0))
    def _():
        pool_ref[...] = jnp.zeros_like(pool_ref)

    @pl.when(k == 0)
    def _():
        acc_ref[...] = jnp.zeros_like(acc_ref)

    acc_ref[...] += jnp.dot(a_ref[0], w_ref[...],
                            preferred_element_type=jnp.float32)

    @pl.when(k == nk - 1)
    def _():
        y = acc_ref[...] * s_ref[...] + b_ref[...]
        y = y * jax.nn.sigmoid(y)
        pool_ref[...] += jnp.sum(y, axis=0, keepdims=True) * inv_hw

    @pl.when((m == nm - 1) & (k == nk - 1))
    def _():
        o_ref[0] = pool_ref[...]


# ----------------------------------------------------------------------------
# pallas_call wrappers
# ----------------------------------------------------------------------------
def fused_matmul(a, w, scale, bias, *, act, gate=None, residual=None,
                 tm_pref=256, tn_pref=256, tk_pref=512):
    """a: (B, M, K) bf16, w: (K, N) bf16, scale/bias: (1, N) f32.
    Optional gate: (B, 1, K) bf16 and residual: (B, M, N) bf16."""
    B, M, K = a.shape
    N = w.shape[1]
    tm = _pick_tile(M, tm_pref, 8)
    tn = _pick_tile(N, tn_pref, LANE)
    tk = _pick_tile(K, tk_pref, LANE)
    grid = (B, M // tm, N // tn, K // tk)

    in_specs = [
        pl.BlockSpec((1, tm, tk), lambda b, m, n, k: (b, m, k)),
        pl.BlockSpec((tk, tn), lambda b, m, n, k: (k, n)),
        pl.BlockSpec((1, tn), lambda b, m, n, k: (0, n)),
        pl.BlockSpec((1, tn), lambda b, m, n, k: (0, n)),
    ]
    args = [a, w, scale, bias]
    if gate is not None:
        in_specs.append(pl.BlockSpec((1, 1, tk), lambda b, m, n, k: (b, 0, k)))
        args.append(gate)
    if residual is not None:
        in_specs.append(pl.BlockSpec((1, tm, tn), lambda b, m, n, k: (b, m, n)))
        args.append(residual)

    kernel = partial(_mm_kernel, act=act, has_gate=gate is not None,
                     has_res=residual is not None)
    return pl.pallas_call(
        kernel,
        out_shape=jax.ShapeDtypeStruct((B, M, N), jnp.bfloat16),
        grid=grid,
        in_specs=in_specs,
        out_specs=pl.BlockSpec((1, tm, tn), lambda b, m, n, k: (b, m, n)),
        scratch_shapes=[pltpu.VMEM((tm, tn), jnp.float32)],
        compiler_params=pltpu.CompilerParams(
            dimension_semantics=("parallel", "parallel", "parallel",
                                 "arbitrary")),
    )(*args)


def conv1x1(x, w, scale, bias, *, act, gate=None, residual=None):
    B, H, W, C = x.shape
    a = x.reshape(B, H * W, C)
    res = None
    if residual is not None:
        res = residual.reshape(B, H * W, residual.shape[-1])
    y = fused_matmul(a, w, scale, bias, act=act, gate=gate, residual=res)
    return y.reshape(B, H, W, w.shape[1])


def dwconv(x, w, scale, bias, *, k):
    """Depthwise kxk conv, stride 1, 'same' padding + BN + SiLU.  x: NHWC."""
    B, H, W, C = x.shape
    pad = (k - 1) // 2
    xp = jnp.pad(x, ((0, 0), (pad, pad), (pad, pad), (0, 0)))
    Hp, Wp = H + 2 * pad, W + 2 * pad
    ct = LANE
    grid = (B, C // ct)
    return pl.pallas_call(
        partial(_dw_kernel, k=k, H=H, W=W),
        out_shape=jax.ShapeDtypeStruct((B, H, W, C), jnp.bfloat16),
        grid=grid,
        in_specs=[
            pl.BlockSpec((1, Hp, Wp, ct), lambda b, c: (b, 0, 0, c)),
            pl.BlockSpec((k * k, ct), lambda b, c: (0, c)),
            pl.BlockSpec((1, ct), lambda b, c: (0, c)),
            pl.BlockSpec((1, ct), lambda b, c: (0, c)),
        ],
        out_specs=pl.BlockSpec((1, H, W, ct), lambda b, c: (b, 0, 0, c)),
        compiler_params=pltpu.CompilerParams(
            dimension_semantics=("parallel", "parallel")),
    )(xp, w, scale, bias)


def global_pool(x):
    """(B, H, W, C) bf16 -> (B, C) f32 mean over HW (gridded accumulation)."""
    B, H, W, C = x.shape
    hw = H * W
    xf = x.reshape(B, hw, C)
    t = _pick_tile(hw, 2048, 8)
    grid = (hw // t,)
    return pl.pallas_call(
        partial(_pool_kernel, inv_hw=1.0 / hw),
        out_shape=jax.ShapeDtypeStruct((B, C), jnp.float32),
        grid=grid,
        in_specs=[pl.BlockSpec((B, t, C), lambda i: (0, i, 0))],
        out_specs=pl.BlockSpec((B, C), lambda i: (0, 0)),
        compiler_params=pltpu.CompilerParams(
            dimension_semantics=("arbitrary",)),
    )(xf)


def se_fc(pooled, w1, b1, w2, b2):
    """Pooled (B, C) f32 -> gate (B, C) bf16 (tiny; single VMEM block)."""
    B = pooled.shape[0]
    C = w2.shape[1]
    return pl.pallas_call(
        _se_fc_kernel,
        out_shape=jax.ShapeDtypeStruct((B, C), jnp.bfloat16),
        in_specs=[_VMEM] * 5,
        out_specs=_VMEM,
    )(pooled, w1, b1, w2, b2)


def head_pool(x, w, scale, bias):
    """Head 1x1 conv + BN + SiLU + AdaptiveAvgPool2d(1) + flatten, fused."""
    B, H, W, K = x.shape
    hw = H * W
    a = x.reshape(B, hw, K)
    N = w.shape[1]
    tm = _pick_tile(hw, 256, 8)
    tn = _pick_tile(N, 256, LANE)
    tk = _pick_tile(K, 512, LANE)
    grid = (B, N // tn, hw // tm, K // tk)
    out = pl.pallas_call(
        partial(_head_pool_kernel, inv_hw=1.0 / hw),
        out_shape=jax.ShapeDtypeStruct((B, 1, N), jnp.float32),
        grid=grid,
        in_specs=[
            pl.BlockSpec((1, tm, tk), lambda b, n, m, k: (b, m, k)),
            pl.BlockSpec((tk, tn), lambda b, n, m, k: (k, n)),
            pl.BlockSpec((1, tn), lambda b, n, m, k: (0, n)),
            pl.BlockSpec((1, tn), lambda b, n, m, k: (0, n)),
        ],
        out_specs=pl.BlockSpec((1, 1, tn), lambda b, n, m, k: (b, 0, n)),
        scratch_shapes=[pltpu.VMEM((tm, tn), jnp.float32),
                        pltpu.VMEM((1, tn), jnp.float32)],
        compiler_params=pltpu.CompilerParams(
            dimension_semantics=("parallel", "parallel", "arbitrary",
                                 "arbitrary")),
    )(a, w, scale, bias)
    return out.reshape(B, N)


def stem_conv(x, w, scale, bias):
    """Stem 3x3 s2 conv + BN + SiLU.  cin=3 so a tiny im2col (27->128 padded
    K) feeding the gridded GEMM is cheap; all other convs avoid im2col."""
    B, H, W, _ = x.shape
    k, stride, pad = 3, 2, 1
    xp = jnp.pad(x, ((0, 0), (pad, pad), (pad, pad), (0, 0)))
    Ho = (H + 2 * pad - k) // stride + 1
    Wo = (W + 2 * pad - k) // stride + 1
    taps = []
    for dy in range(k):
        for dx in range(k):
            taps.append(xp[:, dy:dy + stride * Ho:stride,
                           dx:dx + stride * Wo:stride, :])
    a = jnp.concatenate(taps, axis=-1)                # (B, Ho, Wo, 27)
    kpad = w.shape[0]
    a = jnp.pad(a, ((0, 0), (0, 0), (0, 0), (0, kpad - a.shape[-1])))
    a = a.reshape(B, Ho * Wo, kpad)
    y = fused_matmul(a, w, scale, bias, act="silu")
    return y.reshape(B, Ho, Wo, w.shape[1])


# ----------------------------------------------------------------------------
# jitted stages (block-level jit: repeated blocks reuse compiled programs)
# ----------------------------------------------------------------------------
@jax.jit
def _stem_jit(x_nchw, w, s, b):
    x = jnp.transpose(x_nchw, (0, 2, 3, 1)).astype(jnp.bfloat16)  # NCHW->NHWC
    return stem_conv(x, w, s, b)


@partial(jax.jit, static_argnames=("stride", "use_res"))
def _mbconv_jit(x, bp, *, stride, use_res):
    inp = x
    h = x
    if "expand_w" in bp:
        h = conv1x1(h, bp["expand_w"], bp["expand_s"], bp["expand_b"],
                    act="silu")
    k = int(round(float(np.sqrt(bp["dw_w"].shape[0]))))
    h = dwconv(h, bp["dw_w"], bp["dw_s"], bp["dw_b"], k=k)
    if stride > 1:
        # TODO(synk): stride-2 DW is computed at stride 1 and subsampled here
        # (only 4 of 32 blocks); a phase-split DW kernel would avoid the 4x.
        h = h[:, ::stride, ::stride, :]
    B, H, W, Cm = h.shape
    pooled = global_pool(h)                                       # (B, Cm) f32
    gate = se_fc(pooled, bp["se_w1"], bp["se_b1"], bp["se_w2"], bp["se_b2"])
    res = inp if use_res else None
    # TODO(synk): stochastic depth is identity in eval mode, so omitted.
    h = conv1x1(h, bp["proj_w"], bp["proj_s"], bp["proj_b"], act="none",
                gate=gate.reshape(B, 1, Cm), residual=res)
    return h


@jax.jit
def _head_jit(x, w, s, b):
    return head_pool(x, w, s, b)


def efficientnet_b4_forward(params, x_nchw):
    """x_nchw: (B, 3, H, W) float32 -> (B, 1792) float32 features."""
    x = _stem_jit(x_nchw, params["stem_w"], params["stem_s"], params["stem_b"])
    for bp, (expand, k, stride, cin, cout) in zip(params["blocks"], BLOCK_CFGS):
        use_res = (stride == 1 and cin == cout)
        x = _mbconv_jit(x, bp, stride=stride, use_res=use_res)
    return _head_jit(x, params["head_w"], params["head_s"], params["head_b"])


# ----------------------------------------------------------------------------
# Parameters (synthetic deterministic init; eval-mode BN folded to scale=1,
# bias=0).  All channel dims zero-padded to multiples of 128; padded channels
# stay exactly zero through the whole network.
# ----------------------------------------------------------------------------
def make_params(key):
    keys = iter(jax.random.split(key, 8 * len(BLOCK_CFGS) + 8))

    def randn(shape, fan_in):
        return (jax.random.normal(next(keys), shape, jnp.float32)
                * float(np.sqrt(2.0 / fan_in)))

    def dense(cin, cout, fan_in=None):
        w = randn((cin, cout), fan_in or cin)
        w = jnp.pad(w, ((0, _rup(cin) - cin), (0, _rup(cout) - cout)))
        return w.astype(jnp.bfloat16)

    def bn(c):
        cp = _rup(c)
        return jnp.ones((1, cp), jnp.float32), jnp.zeros((1, cp), jnp.float32)

    params = {}
    # stem 3x3: flattened (27, 48), K padded to 128.
    w = randn((27, STEM_CH), 27)
    params["stem_w"] = jnp.pad(
        w, ((0, LANE - 27), (0, _rup(STEM_CH) - STEM_CH))).astype(jnp.bfloat16)
    params["stem_s"], params["stem_b"] = bn(STEM_CH)

    blocks = []
    for expand, k, _s, cin, cout in BLOCK_CFGS:
        mid = cin * expand
        sq = max(1, cin // 4)
        bp = {}
        if expand != 1:
            bp["expand_w"] = dense(cin, mid)
            bp["expand_s"], bp["expand_b"] = bn(mid)
        dw = randn((k * k, mid), k * k)
        bp["dw_w"] = jnp.pad(dw, ((0, 0), (0, _rup(mid) - mid))
                             ).astype(jnp.bfloat16)
        bp["dw_s"], bp["dw_b"] = bn(mid)
        bp["se_w1"] = dense(mid, sq)
        bp["se_b1"] = jnp.zeros((1, _rup(sq)), jnp.float32)
        bp["se_w2"] = dense(sq, mid)
        b2 = jnp.full((1, mid), 2.0, jnp.float32)
        bp["se_b2"] = jnp.pad(b2, ((0, 0), (0, _rup(mid) - mid)))
        bp["proj_w"] = dense(mid, cout)
        bp["proj_s"], bp["proj_b"] = bn(cout)
        blocks.append(bp)
    params["blocks"] = blocks

    params["head_w"] = dense(BLOCK_CFGS[-1][4], HEAD_CH)
    params["head_s"], params["head_b"] = bn(HEAD_CH)
    return params


# ----------------------------------------------------------------------------
if __name__ == "__main__":
    # Small input consistent with an NCHW image batch: (B=2, C=3, H=W=32).
    x = jax.random.normal(jax.random.PRNGKey(0), (2, 3, 32, 32), jnp.float32)
    params = make_params(jax.random.PRNGKey(42))

    feats = efficientnet_b4_forward(params, x)
    feats = jax.block_until_ready(feats)

    assert feats.shape == (2, HEAD_CH), feats.shape
    assert feats.dtype == jnp.float32
    assert bool(jnp.all(jnp.isfinite(feats)))
    print("KERNEL_OK")
</pallas_src>

<mosaic_0001>
module attributes {stable_mosaic.version = 11 : i64} {
  func.func @_mm_kernel(%arg0: i32, %arg1: i32, %arg2: i32, %arg3: i32, %arg4: memref<1x256x128xbf16, #tpu.memory_space<vmem>>, %arg5: memref<128x128xbf16, #tpu.memory_space<vmem>>, %arg6: memref<1x128xf32, #tpu.memory_space<vmem>>, %arg7: memref<1x128xf32, #tpu.memory_space<vmem>>, %arg8: memref<1x256x128xbf16, #tpu.memory_space<vmem>>, %arg9: memref<256x128xf32, #tpu.memory_space<vmem>>) attributes {dimension_semantics = [#tpu.dimension_semantics<parallel>, #tpu.dimension_semantics<parallel>, #tpu.dimension_semantics<parallel>, #tpu.dimension_semantics<arbitrary>], iteration_bounds = array<i64: 2, 1, 1, 1>, scalar_prefetch = 0 : i64, scratch_operands = 1 : i64, tpu.core_type = #tpu.core_type<tc>, window_params = [{transform_indices = @transform_0, window_bounds = array<i64: 1, 256, 128>}, {transform_indices = @transform_1, window_bounds = array<i64: 128, 128>}, {transform_indices = @transform_2, window_bounds = array<i64: 1, 128>}, {transform_indices = @transform_3, window_bounds = array<i64: 1, 128>}, {transform_indices = @transform_4, window_bounds = array<i64: 1, 256, 128>}]} {
    %c0_i32 = arith.constant 0 : i32
    %0 = arith.cmpi eq, %arg3, %c0_i32 : i32
    %1 = arith.extui %0 : i1 to i32
    %c0_i32_0 = arith.constant 0 : i32
    %2 = arith.cmpi ne, %1, %c0_i32_0 : i32
    scf.if %2 {
      %cst_11 = arith.constant 0.000000e+00 : f32
      %13 = vector.broadcast %cst_11 : f32 to vector<256x128xf32>
      %c0_12 = arith.constant 0 : index
      %c0_13 = arith.constant 0 : index
      %14 = vector.load %arg9[%c0_12, %c0_13] : memref<256x128xf32, #tpu.memory_space<vmem>>, vector<256x128xf32>
      tpu.vector_store %arg9[%c0_12, %c0_13], %13 {strides = array<i32>} : memref<256x128xf32, #tpu.memory_space<vmem>>, vector<256x128xf32>,
    } else {
    }
    %c0 = arith.constant 0 : index
    %c0_1 = arith.constant 0 : index
    %c0_2 = arith.constant 0 : index
    %3 = vector.load %arg4[%c0, %c0_1, %c0_2] : memref<1x256x128xbf16, #tpu.memory_space<vmem>>, vector<1x256x128xbf16>
    %4 = vector.shape_cast %3 : vector<1x256x128xbf16> to vector<256x128xbf16>
    %c0_3 = arith.constant 0 : index
    %c0_4 = arith.constant 0 : index
    %5 = vector.load %arg9[%c0_3, %c0_4] : memref<256x128xf32, #tpu.memory_space<vmem>>, vector<256x128xf32>
    %c0_5 = arith.constant 0 : index
    %c0_6 = arith.constant 0 : index
    %6 = vector.load %arg5[%c0_5, %c0_6] : memref<128x128xbf16, #tpu.memory_space<vmem>>, vector<128x128xbf16>
    %cst = arith.constant dense<0.000000e+00> : vector<256x128xf32>
    %7 = tpu.matmul %4, %6, %cst {dimension_numbers = #tpu.dot_dimension_numbers<[1], [0], [0], [1], [0, 0, 1, 1], [], []>} : vector<256x128xbf16>, vector<128x128xbf16>, vector<256x128xf32> -> vector<256x128xf32>
    %8 = arith.addf %5, %7 : vector<256x128xf32>
    %c0_7 = arith.constant 0 : index
    %c0_8 = arith.constant 0 : index
    %9 = vector.load %arg9[%c0_7, %c0_8] : memref<256x128xf32, #tpu.memory_space<vmem>>, vector<256x128xf32>
    tpu.vector_store %arg9[%c0_7, %c0_8], %8 {strides = array<i32>} : memref<256x128xf32, #tpu.memory_space<vmem>>, vector<256x128xf32>,
    %c0_i32_9 = arith.constant 0 : i32
    %10 = arith.cmpi eq, %arg3, %c0_i32_9 : i32
    %11 = arith.extui %10 : i1 to i32
    %c0_i32_10 = arith.constant 0 : i32
    %12 = arith.cmpi ne, %11, %c0_i32_10 : i32
    scf.if %12 {
      %c0_11 = arith.constant 0 : index
      %c0_12 = arith.constant 0 : index
      %13 = vector.load %arg9[%c0_11, %c0_12] : memref<256x128xf32, #tpu.memory_space<vmem>>, vector<256x128xf32>
      %c0_13 = arith.constant 0 : index
      %c0_14 = arith.constant 0 : index
      %14 = vector.load %arg6[%c0_13, %c0_14] : memref<1x128xf32, #tpu.memory_space<vmem>>, vector<1x128xf32>
      %15 = vector.broadcast %14 : vector<1x128xf32> to vector<256x128xf32>
      %16 = arith.mulf %13, %15 : vector<256x128xf32>
      %c0_15 = arith.constant 0 : index
      %c0_16 = arith.constant 0 : index
      %17 = vector.load %arg7[%c0_15, %c0_16] : memref<1x128xf32, #tpu.memory_space<vmem>>, vector<1x128xf32>
      %18 = vector.broadcast %17 : vector<1x128xf32> to vector<256x128xf32>
      %19 = arith.addf %16, %18 : vector<256x128xf32>
      %20 = arith.negf %19 : vector<256x128xf32>
      %21 = math.exp %20 : vector<256x128xf32>
      %cst_17 = arith.constant 1.000000e+00 : f32
      %22 = vector.broadcast %cst_17 : f32 to vector<256x128xf32>
      %23 = arith.addf %22, %21 : vector<256x128xf32>
      %24 = arith.divf %22, %23 : vector<256x128xf32>
      %25 = arith.mulf %19, %24 : vector<256x128xf32>
      %26 = arith.truncf %25 : vector<256x128xf32> to vector<256x128xbf16>
      %c0_18 = arith.constant 0 : index
      %c0_19 = arith.constant 0 : index
      %c0_20 = arith.constant 0 : index
      %27 = vector.load %arg8[%c0_18, %c0_19, %c0_20] : memref<1x256x128xbf16, #tpu.memory_space<vmem>>, vector<1x256x128xbf16>
      %28 = vector.shape_cast %27 : vector<1x256x128xbf16> to vector<256x128xbf16>
      %29 = vector.shape_cast %26 : vector<256x128xbf16> to vector<1x256x128xbf16>
      tpu.vector_store %arg8[%c0_18, %c0_19, %c0_20], %29 {strides = array<i32>} : memref<1x256x128xbf16, #tpu.memory_space<vmem>>, vector<1x256x128xbf16>,
    } else {
    }
    return
  }
  func.func @transform_0(%arg0: i32, %arg1: i32, %arg2: i32, %arg3: i32) -> (i32, i32, i32) {
    %c0_i32 = arith.constant 0 : i32
    return %arg0, %arg1, %arg3 : i32, i32, i32
  }
  func.func @transform_1(%arg0: i32, %arg1: i32, %arg2: i32, %arg3: i32) -> (i32, i32) {
    %c0_i32 = arith.constant 0 : i32
    return %arg3, %arg2 : i32, i32
  }
  func.func @transform_2(%arg0: i32, %arg1: i32, %arg2: i32, %arg3: i32) -> (i32, i32) {
    %c0_i32 = arith.constant 0 : i32
    %c0_i32_0 = arith.constant 0 : i32
    return %c0_i32, %arg2 : i32, i32
  }
  func.func @transform_3(%arg0: i32, %arg1: i32, %arg2: i32, %arg3: i32) -> (i32, i32) {
    %c0_i32 = arith.constant 0 : i32
    %c0_i32_0 = arith.constant 0 : i32
    return %c0_i32, %arg2 : i32, i32
  }
  func.func @transform_4(%arg0: i32, %arg1: i32, %arg2: i32, %arg3: i32) -> (i32, i32, i32) {
    %c0_i32 = arith.constant 0 : i32
    return %arg0, %arg1, %arg2 : i32, i32, i32
  }
}

</mosaic_0001>

<llo_original>
// kernel: _stem_jit.1
$region0: #{_stem_jit.1}
  #allocation0 [shape = 'u32[]', space=smem, size = 0x4, offset = 0x4, fixed_abs, tag = 'smem constant byte address 0x4 - core index']
  #allocation1 [shape = 'u32[144,128]{1,0:T(1,128)}', space=vmem, size = 0x12000, scoped, tag = 'internal scratch']
  #allocation2 [shape = 'f32[256,128]{1,0:T(8,128)}', space=vmem, size = 0x20000, scoped, tag = 'scratch operand']
  %s0 = inlined_call_operand.vmem [shape: bf16[2,256,128], index: 0, kind: input, shape index: {}]
  %s1 = inlined_call_operand.vmem [shape: bf16[128,128], index: 1, kind: input, shape index: {}]
  %s2 = inlined_call_operand.vmem [shape: f32[1,128], index: 2, kind: input, shape index: {}]
  %s3 = inlined_call_operand.vmem [shape: f32[1,128], index: 3, kind: input, shape index: {}]
  %s4 = inlined_call_operand.hbm [shape: bf16[2,256,128], index: 4, kind: output, shape index: {}]
  %s5 = sld [smem:[#allocation0]]
  $region57: #{_stem_jit.1} parent=0
    _
  %s7 = ssub.s32 1, %s5
  %s8 = scalar_select 0, %s7, %s5
  $region1: #{_stem_jit.1} parent=0
    #allocation3 [shape = 'u8[131072]{0}', space=vmem, size = 0x20000, scoped, tag = 'output window, operand 0']
    #allocation4 [shape = 's32[2]{0}', space=sflag, size = 0x8, scoped, tag = 'scoped memory for _stem_jit.1']
    %9 = vsyncpa [#allocation4], 0
    %s10 = scalar_lea.sflag [#allocation4], 1
    %11 = vsyncpa %s10, 0
    loop: start=0, step=1, limit=4
    $region2: #{_stem_jit.1} parent=1 // loop_pre_header
      _
    $region3: #{_stem_jit.1} parent=1 // loop_header
      %s13 = sphi 0, %s17
      %p14 = scmp.ge.s32.totalorder %s13, 4
      %s20 = sphi 0, %s46
      %s21 = sphi 0, %s42
      %s22 = sphi 0, %s38
      %s23 = sphi 0, %s34
      %s24 = sphi 0, %s20
      %s25 = sphi 0, %s21
      %s26 = sphi 0, %s22
      %s27 = sphi 0, %s23
      %s28 = sphi 0, %s24
      %s29 = sphi 0, %s25
      %s30 = sphi 0, %s26
      %s31 = sphi 0, %s27
      %s53 = sphi 0, %s55
      %s56 = sphi 0, %s53
      %s57 = sphi 0, %s56
      %s73 = sphi 0, %s57
      %s81 = sphi 0, %s83
      %s84 = sphi 0, %s81
      %s85 = sphi 0, %s84
      %s101 = sphi 0, %s85
      %s107 = sphi 0, %s109
      %s110 = sphi 0, %s107
      %s111 = sphi 0, %s110
      %s127 = sphi 0, %s111
      %s133 = sphi 0, %s135
      %s136 = sphi 0, %s133
      %s137 = sphi 0, %s136
      %s153 = sphi 0, %s137
      %s163 = sphi 0, %s165
      %s166 = sphi 0, %s163
      %s167 = sphi 0, %s166
      %s183 = sphi 0, %s167
    $region4: #{_stem_jit.1} parent=1 // loop_header_branch
      %16 = sbr.rel (%p14) target = $region8
    $region5: #{_stem_jit.1} parent=1 // loop_body
      %s18 = ssub.s32 %s13, 1
      %s19 = ssub.s32 %s13, 2
      %s32 = sadd.s32 1, %s23
      %p33 = scmp.ge.s32.totalorder %s32, 1
      %s34 = scalar_select %p33, 0, %s32
      %s35 = sadd.s32 1, %s22
      %s36 = scalar_select %p33, %s35, %s22
      %p37 = scmp.ge.s32.totalorder %s36, 1
      %s38 = scalar_select %p37, 0, %s36
      %s39 = sadd.s32 1, %s21
      %s40 = scalar_select %p37, %s39, %s21
      %p41 = scmp.ge.s32.totalorder %s40, 1
      %s42 = scalar_select %p41, 0, %s40
      %s43 = sadd.s32 1, %s20
      %s44 = scalar_select %p41, %s43, %s20
      %p45 = scmp.ge.s32.totalorder %s44, 2
      %s46 = scalar_select %p45, 0, %s44
      %s47 = ssub.s32 %s20, %s46
      %s48 = ssub.s32 %s21, %s42
      %s49 = sor.u32 %s47, %s48
      %s50 = ssub.s32 %s23, %s34
      %s51 = sor.u32 %s49, %s50
      %p52 = scmp.eq.s32.totalorder %s51, 0
      %s54 = sadd.s32 %s53, 1
      %s55 = scalar_select %p52, %s53, %s54
      %p58 = pneg %p52
      %p59 = scmp.eq.s32.totalorder %s13, 1
      %p60 = por %p58, %p59
      %p61 = scmp.ne.s32.totalorder %s53, %s56
      %p62 = scmp.eq.s32.totalorder %s13, 0
      %p63 = por %p61, %p62
      %p64 = scmp.ne.s32.totalorder %s53, %s56
      %p65 = scmp.eq.s32.totalorder %s18, 1
      %p66 = por %p64, %p65
      %p67 = scmp.ne.s32.totalorder %s56, %s57
      %p68 = scmp.eq.s32.totalorder %s18, 0
      %p69 = por %p67, %p68
      %p70 = scmp.ne.s32.totalorder %s56, %s57
      %p71 = scmp.eq.s32.totalorder %s19, 1
      %p72 = por %p70, %p71
      %p74 = scmp.ne.s32.totalorder %s57, %s73
      %p75 = scmp.eq.s32.totalorder %s19, 0
      %p76 = por %p74, %p75
      %s77 = ssub.s32 %s23, %s34
      %s78 = ssub.s32 %s22, %s38
      %s79 = sor.u32 %s77, %s78
      %p80 = scmp.eq.s32.totalorder %s79, 0
      %s82 = sadd.s32 %s81, 1
      %s83 = scalar_select %p80, %s81, %s82
      %p86 = pneg %p80
      %p87 = scmp.eq.s32.totalorder %s13, 1
      %p88 = por %p86, %p87
      %p89 = scmp.ne.s32.totalorder %s81, %s84
      %p90 = scmp.eq.s32.totalorder %s13, 0
      %p91 = por %p89, %p90
      %p92 = scmp.ne.s32.totalorder %s81, %s84
      %p93 = scmp.eq.s32.totalorder %s18, 1
      %p94 = por %p92, %p93
      %p95 = scmp.ne.s32.totalorder %s84, %s85
      %p96 = scmp.eq.s32.totalorder %s18, 0
      %p97 = por %p95, %p96
      %p98 = scmp.ne.s32.totalorder %s84, %s85
      %p99 = scmp.eq.s32.totalorder %s19, 1
      %p100 = por %p98, %p99
      %p102 = scmp.ne.s32.totalorder %s85, %s101
      %p103 = scmp.eq.s32.totalorder %s19, 0
      %p104 = por %p102, %p103
      %s105 = ssub.s32 %s22, %s38
      %p106 = scmp.eq.s32.totalorder %s105, 0
      %s108 = sadd.s32 %s107, 1
      %s109 = scalar_select %p106, %s107, %s108
      %p112 = pneg %p106
      %p113 = scmp.eq.s32.totalorder %s13, 1
      %p114 = por %p112, %p113
      %p115 = scmp.ne.s32.totalorder %s107, %s110
      %p116 = scmp.eq.s32.totalorder %s13, 0
      %p117 = por %p115, %p116
      %p118 = scmp.ne.s32.totalorder %s107, %s110
      %p119 = scmp.eq.s32.totalorder %s18, 1
      %p120 = por %p118, %p119
      %p121 = scmp.ne.s32.totalorder %s110, %s111
      %p122 = scmp.eq.s32.totalorder %s18, 0
      %p123 = por %p121, %p122
      %p124 = scmp.ne.s32.totalorder %s110, %s111
      %p125 = scmp.eq.s32.totalorder %s19, 1
      %p126 = por %p124, %p125
      %p128 = scmp.ne.s32.totalorder %s111, %s127
      %p129 = scmp.eq.s32.totalorder %s19, 0
      %p130 = por %p128, %p129
      %s131 = ssub.s32 %s22, %s38
      %p132 = scmp.eq.s32.totalorder %s131, 0
      %s134 = sadd.s32 %s133, 1
      %s135 = scalar_select %p132, %s133, %s134
      %p138 = pneg %p132
      %p139 = scmp.eq.s32.totalorder %s13, 1
      %p140 = por %p138, %p139
      %p141 = scmp.ne.s32.totalorder %s133, %s136
      %p142 = scmp.eq.s32.totalorder %s13, 0
      %p143 = por %p141, %p142
      %p144 = scmp.ne.s32.totalorder %s133, %s136
      %p145 = scmp.eq.s32.totalorder %s18, 1
      %p146 = por %p144, %p145
      %p147 = scmp.ne.s32.totalorder %s136, %s137
      %p148 = scmp.eq.s32.totalorder %s18, 0
      %p149 = por %p147, %p148
      %p150 = scmp.ne.s32.totalorder %s136, %s137
      %p151 = scmp.eq.s32.totalorder %s19, 1
      %p152 = por %p150, %p151
      %p154 = scmp.ne.s32.totalorder %s137, %s153
      %p155 = scmp.eq.s32.totalorder %s19, 0
      %p156 = por %p154, %p155
      %s157 = ssub.s32 %s20, %s46
      %s158 = ssub.s32 %s21, %s42
      %s159 = sor.u32 %s157, %s158
      %s160 = ssub.s32 %s22, %s38
      %s161 = sor.u32 %s159, %s160
      %p162 = scmp.eq.s32.totalorder %s161, 0
      %s164 = sadd.s32 %s163, 1
      %s165 = scalar_select %p162, %s163, %s164
      %p168 = pneg %p162
      %p169 = scmp.eq.s32.totalorder %s13, 1
      %p170 = por %p168, %p169
      %p171 = scmp.ne.s32.totalorder %s163, %s166
      %p172 = scmp.eq.s32.totalorder %s13, 0
      %p173 = por %p171, %p172
      %p174 = scmp.ne.s32.totalorder %s163, %s166
      %p175 = scmp.eq.s32.totalorder %s18, 1
      %p176 = por %p174, %p175
      %p177 = scmp.ne.s32.totalorder %s166, %s167
      %p178 = scmp.eq.s32.totalorder %s18, 0
      %p179 = por %p177, %p178
      %p180 = scmp.ne.s32.totalorder %s166, %s167
      %p181 = scmp.eq.s32.totalorder %s19, 1
      %p182 = por %p180, %p181
      %p184 = scmp.ne.s32.totalorder %s167, %s183
      %p185 = scmp.eq.s32.totalorder %s19, 0
      %p186 = por %p184, %p185
      %p187 = scmp.le.s32.totalorder 1, %s13
      %p188 = scmp.lt.s32.totalorder %s13, 3
      %p189 = pnand %p187, %p188
      %p190 = pneg %p189
      // Predicated region
      $region9: #{_stem_jit.1} parent=5 // pred_check
        _
      $region10: #{_stem_jit.1} parent=5 // pred_check_branch
        %192 = sbr.rel (%p189) target = $region12
      $region11: #{_stem_jit.1} parent=5 // pred_region
        %s193 = ssub.s32 %s13, 1
        // Predicated region
        $region13: #{_stem_jit.1} parent=11 // pred_check
          %p194 = pneg %p97
        $region14: #{_stem_jit.1} parent=11 // pred_check_branch
          %196 = sbr.rel (%p194) target = $region16
        $region15: #{_stem_jit.1} parent=11 // pred_region
          %s197 = smul.u32 16, %s27
          %p198 = scmp.lt.s32.totalorder %s197, 15
          %s199 = scalar_select %p198, %s197, 15
          %p200 = scmp.lt.s32.totalorder %s26, 0
          %s201 = scalar_select %p200, %s26, 0
          %s202 = sadd.s32 %s201, %s199
          %s203 = smul.addr %s202, 4
          %s204 = scalar_lea.vmem %s1, %s203
          %s205 = smul.u32 16, %s27
        $region16: #{_stem_jit.1} parent=11 // pred_fallthru
          _
        // Predicated region
        $region17: #{_stem_jit.1} parent=11 // pred_check
          %p206 = pneg %p123
        $region18: #{_stem_jit.1} parent=11 // pred_check_branch
          %208 = sbr.rel (%p206) target = $region20
        $region19: #{_stem_jit.1} parent=11 // pred_region
          %p209 = scmp.lt.s32.totalorder %s26, 0
          %s210 = scalar_select %p209, %s26, 0
          %s211 = scalar_lea.vmem %s2, %s210
        $region20: #{_stem_jit.1} parent=11 // pred_fallthru
          _
        // Predicated region
        $region21: #{_stem_jit.1} parent=11 // pred_check
          %p212 = pneg %p149
        $region22: #{_stem_jit.1} parent=11 // pred_check_branch
          %214 = sbr.rel (%p212) target = $region24
        $region23: #{_stem_jit.1} parent=11 // pred_region
          %p215 = scmp.lt.s32.totalorder %s26, 0
          %s216 = scalar_select %p215, %s26, 0
          %s217 = scalar_lea.vmem %s3, %s216
        $region24: #{_stem_jit.1} parent=11 // pred_fallthru
          _
      $region12: #{_stem_jit.1} parent=5 // pred_fallthru
        _
      %p218 = scmp.lt.s32.totalorder %s13, 2
      // Predicated region
      $region25: #{_stem_jit.1} parent=5 // pred_check
        %p219 = pneg %p218
      $region26: #{_stem_jit.1} parent=5 // pred_check_branch
        %221 = sbr.rel (%p219) target = $region28
      $region27: #{_stem_jit.1} parent=5 // pred_region
        // Predicated region
        $region29: #{_stem_jit.1} parent=27 // pred_check
          %p222 = pneg %p63
        $region30: #{_stem_jit.1} parent=27 // pred_check_branch
          %224 = sbr.rel (%p222) target = $region32
        $region31: #{_stem_jit.1} parent=27 // pred_region
          %s225 = smul.u32 32, %s21
          %p226 = scmp.lt.s32.totalorder %s20, 1
          %s227 = scalar_select %p226, %s20, 1
          %p228 = scmp.lt.s32.totalorder %s225, 31
          %s229 = scalar_select %p228, %s225, 31
          %p230 = scmp.lt.s32.totalorder %s23, 0
          %s231 = scalar_select %p230, %s23, 0
          %s232 = sadd.s32 %s231, %s229
          %s233 = smul.addr %s227, 32
          %s234 = sadd.s32 %s232, %s233
          %s235 = smul.addr %s234, 4
          %s236 = scalar_lea.vmem %s0, %s235
          %s237 = smul.u32 32, %s21
        $region32: #{_stem_jit.1} parent=27 // pred_fallthru
          _
      $region28: #{_stem_jit.1} parent=5 // pred_fallthru
        _
      %p238 = scmp.le.s32.totalorder 1, %s13
      %p239 = scmp.lt.s32.totalorder %s13, 3
      %p240 = pnand %p238, %p239
      %p241 = pneg %p240
      // Predicated region
      $region33: #{_stem_jit.1} parent=5 // pred_check
        _
      $region34: #{_stem_jit.1} parent=5 // pred_check_branch
        %243 = sbr.rel (%p240) target = $region36
      $region35: #{_stem_jit.1} parent=5 // pred_region
        %s244 = ssub.s32 %s13, 1
        %s245 = smul.u32 32, %s25
        %p246 = scmp.lt.s32.totalorder %s24, 1
        %s247 = scalar_select %p246, %s24, 1
        %p248 = scmp.lt.s32.totalorder %s245, 31
        %s249 = scalar_select %p248, %s245, 31
        %p250 = scmp.lt.s32.totalorder %s27, 0
        %s251 = scalar_select %p250, %s27, 0
        %s252 = sadd.s32 %s251, %s249
        %s253 = smul.addr %s247, 32
        %s254 = sadd.s32 %s252, %s253
        %s255 = smul.addr %s254, 4
        %s256 = scalar_lea.vmem %s0, %s255
        %p257 = pneg %p69
        %p258 = pneg %p66
        %s259 = smul.u32 16, %s27
        %p260 = scmp.lt.s32.totalorder %s259, 15
        %s261 = scalar_select %p260, %s259, 15
        %p262 = scmp.lt.s32.totalorder %s26, 0
        %s263 = scalar_select %p262, %s26, 0
        %s264 = sadd.s32 %s263, %s261
        %s265 = smul.addr %s264, 4
        %s266 = scalar_lea.vmem %s1, %s265
        %p267 = pneg %p97
        %p268 = pneg %p94
        %p269 = scmp.lt.s32.totalorder %s26, 0
        %s270 = scalar_select %p269, %s26, 0
        %s271 = scalar_lea.vmem %s2, %s270
        %p272 = pneg %p123
        %p273 = pneg %p120
        %p274 = scmp.lt.s32.totalorder %s26, 0
        %s275 = scalar_select %p274, %s26, 0
        %s276 = scalar_lea.vmem %s3, %s275
        %p277 = pneg %p149
        %p278 = pneg %p146
        %p279 = pneg %p179
        %p280 = pneg %p176
        %s281 = sand.u32 %s166, 1
        %s282 = scalar_lea.sflag [#allocation4], %s281
        %s283 = sand.u32 %s166, 1
        %s284 = smul.addr %s283, 128
        %s285 = scalar_lea.vmem [#allocation3], %s284
        %s286 = smul.u32 32, %s25
        %p287 = scmp.lt.s32.totalorder %s24, 1
        %s288 = scalar_select %p287, %s24, 1
        %p289 = scmp.lt.s32.totalorder %s286, 31
        %s290 = scalar_select %p289, %s286, 31
        %p291 = scmp.lt.s32.totalorder %s27, 0
        %s292 = scalar_select %p291, %s27, 0
        %s293 = sadd.s32 %s292, %s290
        %s294 = smul.addr %s288, 32
        %s295 = sadd.s32 %s293, %s294
        %s296 = smul.addr %s295, 4
        %s297 = scalar_lea.vmem %s0, %s296
        %s298 = smul.u32 32, %s25
        %s299 = smul.u32 16, %s27
        %p300 = scmp.lt.s32.totalorder %s299, 15
        %s301 = scalar_select %p300, %s299, 15
        %p302 = scmp.lt.s32.totalorder %s26, 0
        %s303 = scalar_select %p302, %s26, 0
        %s304 = sadd.s32 %s303, %s301
        %s305 = smul.addr %s304, 4
        %s306 = scalar_lea.vmem %s1, %s305
        %s307 = smul.u32 16, %s27
        %p308 = scmp.lt.s32.totalorder %s26, 0
        %s309 = scalar_select %p308, %s26, 0
        %s310 = scalar_lea.vmem %s2, %s309
        %p311 = scmp.lt.s32.totalorder %s26, 0
        %s312 = scalar_select %p311, %s26, 0
        %s313 = scalar_lea.vmem %s3, %s312
        %s314 = smul.u32 32, %s25
        %p316 = scmp.eq.s32.totalorder %s27, 0
        // Predicated region
        $region37: #{_stem_jit.1} parent=35 // pred_check
          %p317 = pneg %p316
        $region38: #{_stem_jit.1} parent=35 // pred_check_branch
          %319 = sbr.rel (%p317) target = $region40
        $region39: #{_stem_jit.1} parent=35 // pred_region
          %320 = vst [vmem:[#allocation2] sm:$0xff] 0.0
          %321 = vst [vmem:[#allocation2 + $0x8] sm:$0xff] 0.0
          %322 = vst [vmem:[#allocation2 + $0x10] sm:$0xff] 0.0
          %323 = vst [vmem:[#allocation2 + $0x18] sm:$0xff] 0.0
          %324 = vst [vmem:[#allocation2 + $0x20] sm:$0xff] 0.0
          %325 = vst [vmem:[#allocation2 + $0x28] sm:$0xff] 0.0
          %326 = vst [vmem:[#allocation2 + $0x30] sm:$0xff] 0.0
          %327 = vst [vmem:[#allocation2 + $0x38] sm:$0xff] 0.0
          %328 = vst [vmem:[#allocation2 + $0x40] sm:$0xff] 0.0
          %329 = vst [vmem:[#allocation2 + $0x48] sm:$0xff] 0.0
          %330 = vst [vmem:[#allocation2 + $0x50] sm:$0xff] 0.0
          %331 = vst [vmem:[#allocation2 + $0x58] sm:$0xff] 0.0
          %332 = vst [vmem:[#allocation2 + $0x60] sm:$0xff] 0.0
          %333 = vst [vmem:[#allocation2 + $0x68] sm:$0xff] 0.0
          %334 = vst [vmem:[#allocation2 + $0x70] sm:$0xff] 0.0
          %335 = vst [vmem:[#allocation2 + $0x78] sm:$0xff] 0.0
          %336 = vst [vmem:[#allocation2 + $0x80] sm:$0xff] 0.0
          %337 = vst [vmem:[#allocation2 + $0x88] sm:$0xff] 0.0
          %338 = vst [vmem:[#allocation2 + $0x90] sm:$0xff] 0.0
          %339 = vst [vmem:[#allocation2 + $0x98] sm:$0xff] 0.0
          %340 = vst [vmem:[#allocation2 + $0xa0] sm:$0xff] 0.0
          %341 = vst [vmem:[#allocation2 + $0xa8] sm:$0xff] 0.0
          %342 = vst [vmem:[#allocation2 + $0xb0] sm:$0xff] 0.0
          %343 = vst [vmem:[#allocation2 + $0xb8] sm:$0xff] 0.0
          %344 = vst [vmem:[#allocation2 + $0xc0] sm:$0xff] 0.0
          %345 = vst [vmem:[#allocation2 + $0xc8] sm:$0xff] 0.0
          %346 = vst [vmem:[#allocation2 + $0xd0] sm:$0xff] 0.0
          %347 = vst [vmem:[#allocation2 + $0xd8] sm:$0xff] 0.0
          %348 = vst [vmem:[#allocation2 + $0xe0] sm:$0xff] 0.0
          %349 = vst [vmem:[#allocation2 + $0xe8] sm:$0xff] 0.0
          %350 = vst [vmem:[#allocation2 + $0xf0] sm:$0xff] 0.0
          %351 = vst [vmem:[#allocation2 + $0xf8] sm:$0xff] 0.0
        $region40: #{_stem_jit.1} parent=35 // pred_fallthru
          _
        %v352 = vld [vmem:[%s297] sm:$0xf]
        %v353 = vld [vmem:[%s297 + $0x4] sm:$0xf]
        %v354 = vld [vmem:[%s297 + $0x8] sm:$0xf]
        %v355 = vld [vmem:[%s297 + $0xc] sm:$0xf]
        %v356 = vld [vmem:[%s297 + $0x10] sm:$0xf]
        %v357 = vld [vmem:[%s297 + $0x14] sm:$0xf]
        %v358 = vld [vmem:[%s297 + $0x18] sm:$0xf]
        %v359 = vld [vmem:[%s297 + $0x1c] sm:$0xf]
        %v360 = vld [vmem:[%s297 + $0x20] sm:$0xf]
        %v361 = vld [vmem:[%s297 + $0x24] sm:$0xf]
        %v362 = vld [vmem:[%s297 + $0x28] sm:$0xf]
        %v363 = vld [vmem:[%s297 + $0x2c] sm:$0xf]
        %v364 = vld [vmem:[%s297 + $0x30] sm:$0xf]
        %v365 = vld [vmem:[%s297 + $0x34] sm:$0xf]
        %v366 = vld [vmem:[%s297 + $0x38] sm:$0xf]
        %v367 = vld [vmem:[%s297 + $0x3c] sm:$0xf]
        %v368 = vld [vmem:[%s297 + $0x40] sm:$0xf]
        %v369 = vld [vmem:[%s297 + $0x44] sm:$0xf]
        %v370 = vld [vmem:[%s297 + $0x48] sm:$0xf]
        %v371 = vld [vmem:[%s297 + $0x4c] sm:$0xf]
        %v372 = vld [vmem:[%s297 + $0x50] sm:$0xf]
        %v373 = vld [vmem:[%s297 + $0x54] sm:$0xf]
        %v374 = vld [vmem:[%s297 + $0x58] sm:$0xf]
        %v375 = vld [vmem:[%s297 + $0x5c] sm:$0xf]
        %v376 = vld [vmem:[%s297 + $0x60] sm:$0xf]
        %v377 = vld [vmem:[%s297 + $0x64] sm:$0xf]
        %v378 = vld [vmem:[%s297 + $0x68] sm:$0xf]
        %v379 = vld [vmem:[%s297 + $0x6c] sm:$0xf]
        %v380 = vld [vmem:[%s297 + $0x70] sm:$0xf]
        %v381 = vld [vmem:[%s297 + $0x74] sm:$0xf]
        %v382 = vld [vmem:[%s297 + $0x78] sm:$0xf]
        %v383 = vld [vmem:[%s297 + $0x7c] sm:$0xf]
        %v384 = vld [vmem:[#allocation2] sm:$0xff]
        %v385 = vld [vmem:[#allocation2 + $0x8] sm:$0xff]
        %v386 = vld [vmem:[#allocation2 + $0x10] sm:$0xff]
        %v387 = vld [vmem:[#allocation2 + $0x18] sm:$0xff]
        %v388 = vld [vmem:[#allocation2 + $0x20] sm:$0xff]
        %v389 = vld [vmem:[#allocation2 + $0x28] sm:$0xff]
        %v390 = vld [vmem:[#allocation2 + $0x30] sm:$0xff]
        %v391 = vld [vmem:[#allocation2 + $0x38] sm:$0xff]
        %v392 = vld [vmem:[#allocation2 + $0x40] sm:$0xff]
        %v393 = vld [vmem:[#allocation2 + $0x48] sm:$0xff]
        %v394 = vld [vmem:[#allocation2 + $0x50] sm:$0xff]
        %v395 = vld [vmem:[#allocation2 + $0x58] sm:$0xff]
        %v396 = vld [vmem:[#allocation2 + $0x60] sm:$0xff]
        %v397 = vld [vmem:[#allocation2 + $0x68] sm:$0xff]
        %v398 = vld [vmem:[#allocation2 + $0x70] sm:$0xff]
        %v399 = vld [vmem:[#allocation2 + $0x78] sm:$0xff]
        %v400 = vld [vmem:[#allocation2 + $0x80] sm:$0xff]
        %v401 = vld [vmem:[#allocation2 + $0x88] sm:$0xff]
        %v402 = vld [vmem:[#allocation2 + $0x90] sm:$0xff]
        %v403 = vld [vmem:[#allocation2 + $0x98] sm:$0xff]
        %v404 = vld [vmem:[#allocation2 + $0xa0] sm:$0xff]
        %v405 = vld [vmem:[#allocation2 + $0xa8] sm:$0xff]
        %v406 = vld [vmem:[#allocation2 + $0xb0] sm:$0xff]
        %v407 = vld [vmem:[#allocation2 + $0xb8] sm:$0xff]
        %v408 = vld [vmem:[#allocation2 + $0xc0] sm:$0xff]
        %v409 = vld [vmem:[#allocation2 + $0xc8] sm:$0xff]
        %v410 = vld [vmem:[#allocation2 + $0xd0] sm:$0xff]
        %v411 = vld [vmem:[#allocation2 + $0xd8] sm:$0xff]
        %v412 = vld [vmem:[#allocation2 + $0xe0] sm:$0xff]
        %v413 = vld [vmem:[#allocation2 + $0xe8] sm:$0xff]
        %v414 = vld [vmem:[#allocation2 + $0xf0] sm:$0xff]
        %v415 = vld [vmem:[#allocation2 + $0xf8] sm:$0xff]
        %v416 = vld [vmem:[%s306] sm:$0xf]
        %v417 = vld [vmem:[%s306 + $0x4] sm:$0xf]
        %v418 = vld [vmem:[%s306 + $0x8] sm:$0xf]
        %v419 = vld [vmem:[%s306 + $0xc] sm:$0xf]
        %v420 = vld [vmem:[%s306 + $0x10] sm:$0xf]
        %v421 = vld [vmem:[%s306 + $0x14] sm:$0xf]
        %v422 = vld [vmem:[%s306 + $0x18] sm:$0xf]
        %v423 = vld [vmem:[%s306 + $0x1c] sm:$0xf]
        %v424 = vld [vmem:[%s306 + $0x20] sm:$0xf]
        %v425 = vld [vmem:[%s306 + $0x24] sm:$0xf]
        %v426 = vld [vmem:[%s306 + $0x28] sm:$0xf]
        %v427 = vld [vmem:[%s306 + $0x2c] sm:$0xf]
        %v428 = vld [vmem:[%s306 + $0x30] sm:$0xf]
        %v429 = vld [vmem:[%s306 + $0x34] sm:$0xf]
        %v430 = vld [vmem:[%s306 + $0x38] sm:$0xf]
        %v431 = vld [vmem:[%s306 + $0x3c] sm:$0xf]
        %v464 = vunpack.c.l.b16 %v352
        %v465 = vunpack.c.l.b16 %v353
        %v466 = vunpack.c.l.b16 %v354
        %v467 = vunpack.c.l.b16 %v355
        %v468 = vunpack.c.l.b16 %v356
        %v469 = vunpack.c.l.b16 %v357
        %v470 = vunpack.c.l.b16 %v358
        %v471 = vunpack.c.l.b16 %v359
        %v472 = vunpack.c.l.b16 %v360
        %v473 = vunpack.c.l.b16 %v361
        %v474 = vunpack.c.l.b16 %v362
        %v475 = vunpack.c.l.b16 %v363
        %v476 = vunpack.c.l.b16 %v364
        %v477 = vunpack.c.l.b16 %v365
        %v478 = vunpack.c.l.b16 %v366
        %v479 = vunpack.c.l.b16 %v367
        %v480 = vunpack.c.l.b16 %v368
        %v481 = vunpack.c.l.b16 %v369
        %v482 = vunpack.c.l.b16 %v370
        %v483 = vunpack.c.l.b16 %v371
        %v484 = vunpack.c.l.b16 %v372
        %v485 = vunpack.c.l.b16 %v373
        %v486 = vunpack.c.l.b16 %v374
        %v487 = vunpack.c.l.b16 %v375
        %v488 = vunpack.c.l.b16 %v376
        %v489 = vunpack.c.l.b16 %v377
        %v490 = vunpack.c.l.b16 %v378
        %v491 = vunpack.c.l.b16 %v379
        %v492 = vunpack.c.l.b16 %v380
        %v493 = vunpack.c.l.b16 %v381
        %v494 = vunpack.c.l.b16 %v382
        %v495 = vunpack.c.l.b16 %v383
        %v496 = vpack.c.b16 %v465, %v464
        %v497 = vpack.c.b16 %v467, %v466
        %v498 = vpack.c.b16 %v469, %v468
        %v499 = vpack.c.b16 %v471, %v470
        %v500 = vpack.c.b16 %v473, %v472
        %v501 = vpack.c.b16 %v475, %v474
        %v502 = vpack.c.b16 %v477, %v476
        %v503 = vpack.c.b16 %v479, %v478
        %v504 = vpack.c.b16 %v481, %v480
        %v505 = vpack.c.b16 %v483, %v482
        %v506 = vpack.c.b16 %v485, %v484
        %v507 = vpack.c.b16 %v487, %v486
        %v508 = vpack.c.b16 %v489, %v488
        %v509 = vpack.c.b16 %v491, %v490
        %v510 = vpack.c.b16 %v493, %v492
        %v511 = vpack.c.b16 %v495, %v494
        %v544 = vunpack.c.l.b16 %v416
        %v545 = vunpack.c.l.b16 %v417
        %v546 = vunpack.c.l.b16 %v418
        %v547 = vunpack.c.l.b16 %v419
        %v548 = vunpack.c.l.b16 %v420
        %v549 = vunpack.c.l.b16 %v421
        %v550 = vunpack.c.l.b16 %v422
        %v551 = vunpack.c.l.b16 %v423
        %v552 = vunpack.c.l.b16 %v424
        %v553 = vunpack.c.l.b16 %v425
        %v554 = vunpack.c.l.b16 %v426
        %v555 = vunpack.c.l.b16 %v427
        %v556 = vunpack.c.l.b16 %v428
        %v557 = vunpack.c.l.b16 %v429
        %v558 = vunpack.c.l.b16 %v430
        %v559 = vunpack.c.l.b16 %v431
        %v560 = vpack.c.b16 %v545, %v544
        %v561 = vpack.c.b16 %v547, %v546
        %v562 = vpack.c.b16 %v549, %v548
        %v563 = vpack.c.b16 %v551, %v550
        %v564 = vpack.c.b16 %v553, %v552
        %v565 = vpack.c.b16 %v555, %v554
        %v566 = vpack.c.b16 %v557, %v556
        %v567 = vpack.c.b16 %v559, %v558
        %576 = vmatprep.subr.bf16.mxu0 0
        %577 = vmatpush1.bf16.msra.mxu0 %v560
        %578 = vmatprep.subr.bf16.mxu0 0
        %579 = vmatpush1.bf16.msra.mxu0 %v561
        %580 = vmatprep.subr.bf16.mxu0 0
        %581 = vmatpush1.bf16.msra.mxu0 %v562
        %582 = vmatprep.subr.bf16.mxu0 0
        %583 = vmatpush1.bf16.msra.mxu0 %v563
        %584 = vmatprep.subr.bf16.mxu0 0
        %585 = vmatpush1.bf16.msra.mxu0 %v564
        %586 = vmatprep.subr.bf16.mxu0 0
        %587 = vmatpush1.bf16.msra.mxu0 %v565
        %588 = vmatprep.subr.bf16.mxu0 0
        %589 = vmatpush1.bf16.msra.mxu0 %v566
        %590 = vmatprep.subr.bf16.mxu0 0
        %591 = vmatpush1.bf16.msra.mxu0 %v567
        %592 = vmatprep.subr.bf16.mxu0 0
        %593 = vmatpush1.bf16.msra.mxu0 0
        %594 = vmatprep.subr.bf16.mxu0 0
        %595 = vmatpush1.bf16.msra.mxu0 0
        %596 = vmatprep.subr.bf16.mxu0 0
        %597 = vmatpush1.bf16.msra.mxu0 0
        %598 = vmatprep.subr.bf16.mxu0 0
        %599 = vmatpush1.bf16.msra.mxu0 0
        %600 = vmatprep.subr.bf16.mxu0 0
        %601 = vmatpush1.bf16.msra.mxu0 0
        %602 = vmatprep.subr.bf16.mxu0 0
        %603 = vmatpush1.bf16.msra.mxu0 0
        %604 = vmatprep.subr.bf16.mxu0 0
        %605 = vmatpush1.bf16.msra.mxu0 0
        %606 = vmatprep.subr.bf16.mxu0 0
        %607 = vmatpush1.bf16.msra.mxu0 0
        %608 = vmatprep.mubr.bf16.mxu0 0
        %609 = vmatmul.mubr.bf16.gmra.mrb[0].mxu0 %v496
        %v610 = vpop.f32.mrb[0].mxu0
        %v611 = vadd.f32 0.0, %v610
        %v612 = vpop.f32.mrb[0].mxu0
        %v613 = vpop.f32.mrb[0].mxu0
        %v614 = vadd.f32 0.0, %v613
        %v615 = vpop.f32.mrb[0].mxu0
        %616 = vmatprep.mubr.bf16.mxu0 0
        %617 = vmatmul.mubr.bf16.gmra.mrb[0].mxu0 %v497
        %v618 = vpop.f32.mrb[0].mxu0
        %v619 = vadd.f32 0.0, %v618
        %v620 = vpop.f32.mrb[0].mxu0
        %v621 = vpop.f32.mrb[0].mxu0
        %v622 = vadd.f32 0.0, %v621
        %v623 = vpop.f32.mrb[0].mxu0
        %624 = vmatprep.mubr.bf16.mxu0 0
        %625 = vmatmul.mubr.bf16.gmra.mrb[0].mxu0 %v498
        %v626 = vpop.f32.mrb[0].mxu0
        %v627 = vadd.f32 0.0, %v626
        %v628 = vpop.f32.mrb[0].mxu0
        %v629 = vpop.f32.mrb[0].mxu0
        %v630 = vadd.f32 0.0, %v629
        %v631 = vpop.f32.mrb[0].mxu0
        %632 = vmatprep.mubr.bf16.mxu0 0
        %633 = vmatmul.mubr.bf16.gmra.mrb[0].mxu0 %v499
        %v634 = vpop.f32.mrb[0].mxu0
        %v635 = vadd.f32 0.0, %v634
        %v636 = vpop.f32.mrb[0].mxu0
        %v637 = vpop.f32.mrb[0].mxu0
        %v638 = vadd.f32 0.0, %v637
        %v639 = vpop.f32.mrb[0].mxu0
        %640 = vmatprep.mubr.bf16.mxu0 0
        %641 = vmatmul.mubr.bf16.gmra.mrb[0].mxu0 %v500
        %v642 = vpop.f32.mrb[0].mxu0
        %v643 = vadd.f32 0.0, %v642
        %v644 = vpop.f32.mrb[0].mxu0
        %v645 = vpop.f32.mrb[0].mxu0
        %v646 = vadd.f32 0.0, %v645
        %v647 = vpop.f32.mrb[0].mxu0
        %648 = vmatprep.mubr.bf16.mxu0 0
        %649 = vmatmul.mubr.bf16.gmra.mrb[0].mxu0 %v501
        %v650 = vpop.f32.mrb[0].mxu0
        %v651 = vadd.f32 0.0, %v650
        %v652 = vpop.f32.mrb[0].mxu0
        %v653 = vpop.f32.mrb[0].mxu0
        %v654 = vadd.f32 0.0, %v653
        %v655 = vpop.f32.mrb[0].mxu0
        %656 = vmatprep.mubr.bf16.mxu0 0
        %657 = vmatmul.mubr.bf16.gmra.mrb[0].mxu0 %v502
        %v658 = vpop.f32.mrb[0].mxu0
        %v659 = vadd.f32 0.0, %v658
        %v660 = vpop.f32.mrb[0].mxu0
        %v661 = vpop.f32.mrb[0].mxu0
        %v662 = vadd.f32 0.0, %v661
        %v663 = vpop.f32.mrb[0].mxu0
        %664 = vmatprep.mubr.bf16.mxu0 0
        %665 = vmatmul.mubr.bf16.gmra.mrb[0].mxu0 %v503
        %v666 = vpop.f32.mrb[0].mxu0
        %v667 = vadd.f32 0.0, %v666
        %v668 = vpop.f32.mrb[0].mxu0
        %v669 = vpop.f32.mrb[0].mxu0
        %v670 = vadd.f32 0.0, %v669
        %v671 = vpop.f32.mrb[0].mxu0
        %672 = vmatprep.mubr.bf16.mxu0 0
        %673 = vmatmul.mubr.bf16.gmra.mrb[0].mxu0 %v504
        %v674 = vpop.f32.mrb[0].mxu0
        %v675 = vadd.f32 0.0, %v674
        %v676 = vpop.f32.mrb[0].mxu0
        %v677 = vpop.f32.mrb[0].mxu0
        %v678 = vadd.f32 0.0, %v677
        %v679 = vpop.f32.mrb[0].mxu0
        %680 = vmatprep.mubr.bf16.mxu0 0
        %681 = vmatmul.mubr.bf16.gmra.mrb[0].mxu0 %v505
        %v682 = vpop.f32.mrb[0].mxu0
        %v683 = vadd.f32 0.0, %v682
        %v684 = vpop.f32.mrb[0].mxu0
        %v685 = vpop.f32.mrb[0].mxu0
        %v686 = vadd.f32 0.0, %v685
        %v687 = vpop.f32.mrb[0].mxu0
        %688 = vmatprep.mubr.bf16.mxu0 0
        %689 = vmatmul.mubr.bf16.gmra.mrb[0].mxu0 %v506
        %v690 = vpop.f32.mrb[0].mxu0
        %v691 = vadd.f32 0.0, %v690
        %v692 = vpop.f32.mrb[0].mxu0
        %v693 = vpop.f32.mrb[0].mxu0
        %v694 = vadd.f32 0.0, %v693
        %v695 = vpop.f32.mrb[0].mxu0
        %696 = vmatprep.mubr.bf16.mxu0 0
        %697 = vmatmul.mubr.bf16.gmra.mrb[0].mxu0 %v507
        %v698 = vpop.f32.mrb[0].mxu0
        %v699 = vadd.f32 0.0, %v698
        %v700 = vpop.f32.mrb[0].mxu0
        %v701 = vpop.f32.mrb[0].mxu0
        %v702 = vadd.f32 0.0, %v701
        %v703 = vpop.f32.mrb[0].mxu0
        %704 = vmatprep.mubr.bf16.mxu0 0
        %705 = vmatmul.mubr.bf16.gmra.mrb[0].mxu0 %v508
        %v706 = vpop.f32.mrb[0].mxu0
        %v707 = vadd.f32 0.0, %v706
        %v708 = vpop.f32.mrb[0].mxu0
        %v709 = vpop.f32.mrb[0].mxu0
        %v710 = vadd.f32 0.0, %v709
        %v711 = vpop.f32.mrb[0].mxu0
        %712 = vmatprep.mubr.bf16.mxu0 0
        %713 = vmatmul.mubr.bf16.gmra.mrb[0].mxu0 %v509
        %v714 = vpop.f32.mrb[0].mxu0
        %v715 = vadd.f32 0.0, %v714
        %v716 = vpop.f32.mrb[0].mxu0
        %v717 = vpop.f32.mrb[0].mxu0
        %v718 = vadd.f32 0.0, %v717
        %v719 = vpop.f32.mrb[0].mxu0
        %720 = vmatprep.mubr.bf16.mxu0 0
        %721 = vmatmul.mubr.bf16.gmra.mrb[0].mxu0 %v510
        %v722 = vpop.f32.mrb[0].mxu0
        %v723 = vadd.f32 0.0, %v722
        %v724 = vpop.f32.mrb[0].mxu0
        %v725 = vpop.f32.mrb[0].mxu0
        %v726 = vadd.f32 0.0, %v725
        %v727 = vpop.f32.mrb[0].mxu0
        %728 = vmatprep.mubr.bf16.mxu0 0
        %729 = vmatmul.mubr.bf16.gmra.mrb[0].mxu0 %v511
        %v730 = vpop.f32.mrb[0].mxu0
        %v731 = vadd.f32 0.0, %v730
        %v732 = vpop.f32.mrb[0].mxu0
        %v733 = vpop.f32.mrb[0].mxu0
        %v734 = vadd.f32 0.0, %v733
        %v735 = vpop.f32.mrb[0].mxu0
        %736 = vdwg.mxu0
        %v737 = vadd.f32 %v384, %v611
        %v738 = vadd.f32 %v385, %v614
        %v739 = vadd.f32 %v386, %v619
        %v740 = vadd.f32 %v387, %v622
        %v741 = vadd.f32 %v388, %v627
        %v742 = vadd.f32 %v389, %v630
        %v743 = vadd.f32 %v390, %v635
        %v744 = vadd.f32 %v391, %v638
        %v745 = vadd.f32 %v392, %v643
        %v746 = vadd.f32 %v393, %v646
        %v747 = vadd.f32 %v394, %v651
        %v748 = vadd.f32 %v395, %v654
        %v749 = vadd.f32 %v396, %v659
        %v750 = vadd.f32 %v397, %v662
        %v751 = vadd.f32 %v398, %v667
        %v752 = vadd.f32 %v399, %v670
        %v753 = vadd.f32 %v400, %v675
        %v754 = vadd.f32 %v401, %v678
        %v755 = vadd.f32 %v402, %v683
        %v756 = vadd.f32 %v403, %v686
        %v757 = vadd.f32 %v404, %v691
        %v758 = vadd.f32 %v405, %v694
        %v759 = vadd.f32 %v406, %v699
        %v760 = vadd.f32 %v407, %v702
        %v761 = vadd.f32 %v408, %v707
        %v762 = vadd.f32 %v409, %v710
        %v763 = vadd.f32 %v410, %v715
        %v764 = vadd.f32 %v411, %v718
        %v765 = vadd.f32 %v412, %v723
        %v766 = vadd.f32 %v413, %v726
        %v767 = vadd.f32 %v414, %v731
        %v768 = vadd.f32 %v415, %v734
        %769 = vst [vmem:[#allocation2] sm:$0xff] %v737
        %770 = vst [vmem:[#allocation2 + $0x8] sm:$0xff] %v738
        %771 = vst [vmem:[#allocation2 + $0x10] sm:$0xff] %v739
        %772 = vst [vmem:[#allocation2 + $0x18] sm:$0xff] %v740
        %773 = vst [vmem:[#allocation2 + $0x20] sm:$0xff] %v741
        %774 = vst [vmem:[#allocation2 + $0x28] sm:$0xff] %v742
        %775 = vst [vmem:[#allocation2 + $0x30] sm:$0xff] %v743
        %776 = vst [vmem:[#allocation2 + $0x38] sm:$0xff] %v744
        %777 = vst [vmem:[#allocation2 + $0x40] sm:$0xff] %v745
        %778 = vst [vmem:[#allocation2 + $0x48] sm:$0xff] %v746
        %779 = vst [vmem:[#allocation2 + $0x50] sm:$0xff] %v747
        %780 = vst [vmem:[#allocation2 + $0x58] sm:$0xff] %v748
        %781 = vst [vmem:[#allocation2 + $0x60] sm:$0xff] %v749
        %782 = vst [vmem:[#allocation2 + $0x68] sm:$0xff] %v750
        %783 = vst [vmem:[#allocation2 + $0x70] sm:$0xff] %v751
        %784 = vst [vmem:[#allocation2 + $0x78] sm:$0xff] %v752
        %785 = vst [vmem:[#allocation2 + $0x80] sm:$0xff] %v753
        %786 = vst [vmem:[#allocation2 + $0x88] sm:$0xff] %v754
        %787 = vst [vmem:[#allocation2 + $0x90] sm:$0xff] %v755
        %788 = vst [vmem:[#allocation2 + $0x98] sm:$0xff] %v756
        %789 = vst [vmem:[#allocation2 + $0xa0] sm:$0xff] %v757
        %790 = vst [vmem:[#allocation2 + $0xa8] sm:$0xff] %v758
        %791 = vst [vmem:[#allocation2 + $0xb0] sm:$0xff] %v759
        %792 = vst [vmem:[#allocation2 + $0xb8] sm:$0xff] %v760
        %793 = vst [vmem:[#allocation2 + $0xc0] sm:$0xff] %v761
        %794 = vst [vmem:[#allocation2 + $0xc8] sm:$0xff] %v762
        %795 = vst [vmem:[#allocation2 + $0xd0] sm:$0xff] %v763
        %796 = vst [vmem:[#allocation2 + $0xd8] sm:$0xff] %v764
        %797 = vst [vmem:[#allocation2 + $0xe0] sm:$0xff] %v765
        %798 = vst [vmem:[#allocation2 + $0xe8] sm:$0xff] %v766
        %799 = vst [vmem:[#allocation2 + $0xf0] sm:$0xff] %v767
        %800 = vst [vmem:[#allocation2 + $0xf8] sm:$0xff] %v768
        // Predicated region
        $region41: #{_stem_jit.1} parent=35 // pred_check
          %p801 = pneg %p316
        $region42: #{_stem_jit.1} parent=35 // pred_check_branch
          %803 = sbr.rel (%p801) target = $region44
        $region43: #{_stem_jit.1} parent=35 // pred_region
          %v804 = vld [vmem:[#allocation2] sm:$0xff]
          %v805 = vld [vmem:[#allocation2 + $0x8] sm:$0xff]
          %v806 = vld [vmem:[#allocation2 + $0x10] sm:$0xff]
          %v807 = vld [vmem:[#allocation2 + $0x18] sm:$0xff]
          %v808 = vld [vmem:[#allocation2 + $0x20] sm:$0xff]
          %v809 = vld [vmem:[#allocation2 + $0x28] sm:$0xff]
          %v810 = vld [vmem:[#allocation2 + $0x30] sm:$0xff]
          %v811 = vld [vmem:[#allocation2 + $0x38] sm:$0xff]
          %v812 = vld [vmem:[#allocation2 + $0x40] sm:$0xff]
          %v813 = vld [vmem:[#allocation2 + $0x48] sm:$0xff]
          %v814 = vld [vmem:[#allocation2 + $0x50] sm:$0xff]
          %v815 = vld [vmem:[#allocation2 + $0x58] sm:$0xff]
          %v816 = vld [vmem:[#allocation2 + $0x60] sm:$0xff]
          %v817 = vld [vmem:[#allocation2 + $0x68] sm:$0xff]
          %v818 = vld [vmem:[#allocation2 + $0x70] sm:$0xff]
          %v819 = vld [vmem:[#allocation2 + $0x78] sm:$0xff]
          %v820 = vld [vmem:[#allocation2 + $0x80] sm:$0xff]
          %v821 = vld [vmem:[#allocation2 + $0x88] sm:$0xff]
          %v822 = vld [vmem:[#allocation2 + $0x90] sm:$0xff]
          %v823 = vld [vmem:[#allocation2 + $0x98] sm:$0xff]
          %v824 = vld [vmem:[#allocation2 + $0xa0] sm:$0xff]
          %v825 = vld [vmem:[#allocation2 + $0xa8] sm:$0xff]
          %v826 = vld [vmem:[#allocation2 + $0xb0] sm:$0xff]
          %v827 = vld [vmem:[#allocation2 + $0xb8] sm:$0xff]
          %v828 = vld [vmem:[#allocation2 + $0xc0] sm:$0xff]
          %v829 = vld [vmem:[#allocation2 + $0xc8] sm:$0xff]
          %v830 = vld [vmem:[#allocation2 + $0xd0] sm:$0xff]
          %v831 = vld [vmem:[#allocation2 + $0xd8] sm:$0xff]
          %v832 = vld [vmem:[#allocation2 + $0xe0] sm:$0xff]
          %v833 = vld [vmem:[#allocation2 + $0xe8] sm:$0xff]
          %v834 = vld [vmem:[#allocation2 + $0xf0] sm:$0xff]
          %v835 = vld [vmem:[#allocation2 + $0xf8] sm:$0xff]
          %v836 = vld [vmem:[%s310] sm:$0x1]
          %v838 = vlaneseq
          %v839 = vshrl.u32 %v838, 7
          %v840 = vsub.s32 0, %v839
          %v841 = vrot.slane %v836, %v840
          %v843 = vmul.f32 %v804, %v841
          %v844 = vmul.f32 %v805, %v841
          %v845 = vmul.f32 %v806, %v841
          %v846 = vmul.f32 %v807, %v841
          %v847 = vmul.f32 %v808, %v841
          %v848 = vmul.f32 %v809, %v841
          %v849 = vmul.f32 %v810, %v841
          %v850 = vmul.f32 %v811, %v841
          %v851 = vmul.f32 %v812, %v841
          %v852 = vmul.f32 %v813, %v841
          %v853 = vmul.f32 %v814, %v841
          %v854 = vmul.f32 %v815, %v841
          %v855 = vmul.f32 %v816, %v841
          %v856 = vmul.f32 %v817, %v841
          %v857 = vmul.f32 %v818, %v841
          %v858 = vmul.f32 %v819, %v841
          %v859 = vmul.f32 %v820, %v841
          %v860 = vmul.f32 %v821, %v841
          %v861 = vmul.f32 %v822, %v841
          %v862 = vmul.f32 %v823, %v841
          %v863 = vmul.f32 %v824, %v841
          %v864 = vmul.f32 %v825, %v841
          %v865 = vmul.f32 %v826, %v841
          %v866 = vmul.f32 %v827, %v841
          %v867 = vmul.f32 %v828, %v841
          %v868 = vmul.f32 %v829, %v841
          %v869 = vmul.f32 %v830, %v841
          %v870 = vmul.f32 %v831, %v841
          %v871 = vmul.f32 %v832, %v841
          %v872 = vmul.f32 %v833, %v841
          %v873 = vmul.f32 %v834, %v841
          %v874 = vmul.f32 %v835, %v841
          %v875 = vld [vmem:[%s313] sm:$0x1]
          %v877 = vlaneseq
          %v878 = vshrl.u32 %v877, 7
          %v879 = vsub.s32 0, %v878
          %v880 = vrot.slane %v875, %v879
          %v882 = vadd.f32 %v843, %v880
          %v883 = vadd.f32 %v844, %v880
          %v884 = vadd.f32 %v845, %v880
          %v885 = vadd.f32 %v846, %v880
          %v886 = vadd.f32 %v847, %v880
          %v887 = vadd.f32 %v848, %v880
          %v888 = vadd.f32 %v849, %v880
          %v889 = vadd.f32 %v850, %v880
          %v890 = vadd.f32 %v851, %v880
          %v891 = vadd.f32 %v852, %v880
          %v892 = vadd.f32 %v853, %v880
          %v893 = vadd.f32 %v854, %v880
          %v894 = vadd.f32 %v855, %v880
          %v895 = vadd.f32 %v856, %v880
          %v896 = vadd.f32 %v857, %v880
          %v897 = vadd.f32 %v858, %v880
          %v898 = vadd.f32 %v859, %v880
          %v899 = vadd.f32 %v860, %v880
          %v900 = vadd.f32 %v861, %v880
          %v901 = vadd.f32 %v862, %v880
          %v902 = vadd.f32 %v863, %v880
          %v903 = vadd.f32 %v864, %v880
          %v904 = vadd.f32 %v865, %v880
          %v905 = vadd.f32 %v866, %v880
          %v906 = vadd.f32 %v867, %v880
          %v907 = vadd.f32 %v868, %v880
          %v908 = vadd.f32 %v869, %v880
          %v909 = vadd.f32 %v870, %v880
          %v910 = vadd.f32 %v871, %v880
          %v911 = vadd.f32 %v872, %v880
          %v912 = vadd.f32 %v873, %v880
          %v913 = vadd.f32 %v874, %v880
          %v914 = vxor.u32 %v882, 2147483648
          %v915 = vxor.u32 %v883, 2147483648
          %v916 = vxor.u32 %v884, 2147483648
          %v917 = vxor.u32 %v885, 2147483648
          %v918 = vxor.u32 %v886, 2147483648
          %v919 = vxor.u32 %v887, 2147483648
          %v920 = vxor.u32 %v888, 2147483648
          %v921 = vxor.u32 %v889, 2147483648
          %v922 = vxor.u32 %v890, 2147483648
          %v923 = vxor.u32 %v891, 2147483648
          %v924 = vxor.u32 %v892, 2147483648
          %v925 = vxor.u32 %v893, 2147483648
          %v926 = vxor.u32 %v894, 2147483648
          %v927 = vxor.u32 %v895, 2147483648
          %v928 = vxor.u32 %v896, 2147483648
          %v929 = vxor.u32 %v897, 2147483648
          %v930 = vxor.u32 %v898, 2147483648
          %v931 = vxor.u32 %v899, 2147483648
          %v932 = vxor.u32 %v900, 2147483648
          %v933 = vxor.u32 %v901, 2147483648
          %v934 = vxor.u32 %v902, 2147483648
          %v935 = vxor.u32 %v903, 2147483648
          %v936 = vxor.u32 %v904, 2147483648
          %v937 = vxor.u32 %v905, 2147483648
          %v938 = vxor.u32 %v906, 2147483648
          %v939 = vxor.u32 %v907, 2147483648
          %v940 = vxor.u32 %v908, 2147483648
          %v941 = vxor.u32 %v909, 2147483648
          %v942 = vxor.u32 %v910, 2147483648
          %v943 = vxor.u32 %v911, 2147483648
          %v944 = vxor.u32 %v912, 2147483648
          %v945 = vxor.u32 %v913, 2147483648
          %v946 = vmul.f32 %v914, 1.442695
          %v947 = vpow.pop %v946
          %v948 = vmul.f32 %v915, 1.442695
          %v949 = vpow.pop %v948
          %v950 = vmul.f32 %v916, 1.442695
          %v951 = vpow.pop %v950
          %v952 = vmul.f32 %v917, 1.442695
          %v953 = vpow.pop %v952
          %v954 = vmul.f32 %v918, 1.442695
          %v955 = vpow.pop %v954
          %v956 = vmul.f32 %v919, 1.442695
          %v957 = vpow.pop %v956
          %v958 = vmul.f32 %v920, 1.442695
          %v959 = vpow.pop %v958
          %v960 = vmul.f32 %v921, 1.442695
          %v961 = vpow.pop %v960
          %v962 = vmul.f32 %v922, 1.442695
          %v963 = vpow.pop %v962
          %v964 = vmul.f32 %v923, 1.442695
          %v965 = vpow.pop %v964
          %v966 = vmul.f32 %v924, 1.442695
          %v967 = vpow.pop %v966
          %v968 = vmul.f32 %v925, 1.442695
          %v969 = vpow.pop %v968
          %v970 = vmul.f32 %v926, 1.442695
          %v971 = vpow.pop %v970
          %v972 = vmul.f32 %v927, 1.442695
          %v973 = vpow.pop %v972
          %v974 = vmul.f32 %v928, 1.442695
          %v975 = vpow.pop %v974
          %v976 = vmul.f32 %v929, 1.442695
          %v977 = vpow.pop %v976
          %v978 = vmul.f32 %v930, 1.442695
          %v979 = vpow.pop %v978
          %v980 = vmul.f32 %v931, 1.442695
          %v981 = vpow.pop %v980
          %v982 = vmul.f32 %v932, 1.442695
          %v983 = vpow.pop %v982
          %v984 = vmul.f32 %v933, 1.442695
          %v985 = vpow.pop %v984
          %v986 = vmul.f32 %v934, 1.442695
          %v987 = vpow.pop %v986
          %v988 = vmul.f32 %v935, 1.442695
          %v989 = vpow.pop %v988
          %v990 = vmul.f32 %v936, 1.442695
          %v991 = vpow.pop %v990
          %v992 = vmul.f32 %v937, 1.442695
          %v993 = vpow.pop %v992
          %v994 = vmul.f32 %v938, 1.442695
          %v995 = vpow.pop %v994
          %v996 = vmul.f32 %v939, 1.442695
          %v997 = vpow.pop %v996
          %v998 = vmul.f32 %v940, 1.442695
          %v999 = vpow.pop %v998
          %v1000 = vmul.f32 %v941, 1.442695
          %v1001 = vpow.pop %v1000
          %v1002 = vmul.f32 %v942, 1.442695
          %v1003 = vpow.pop %v1002
          %v1004 = vmul.f32 %v943, 1.442695
          %v1005 = vpow.pop %v1004
          %v1006 = vmul.f32 %v944, 1.442695
          %v1007 = vpow.pop %v1006
          %v1008 = vmul.f32 %v945, 1.442695
          %v1009 = vpow.pop %v1008
          %v1010 = vadd.f32 %v947, 1.0
          %v1011 = vadd.f32 %v949, 1.0
          %v1012 = vadd.f32 %v951, 1.0
          %v1013 = vadd.f32 %v953, 1.0
          %v1014 = vadd.f32 %v955, 1.0
          %v1015 = vadd.f32 %v957, 1.0
          %v1016 = vadd.f32 %v959, 1.0
          %v1017 = vadd.f32 %v961, 1.0
          %v1018 = vadd.f32 %v963, 1.0
          %v1019 = vadd.f32 %v965, 1.0
          %v1020 = vadd.f32 %v967, 1.0
          %v1021 = vadd.f32 %v969, 1.0
          %v1022 = vadd.f32 %v971, 1.0
          %v1023 = vadd.f32 %v973, 1.0
          %v1024 = vadd.f32 %v975, 1.0
          %v1025 = vadd.f32 %v977, 1.0
          %v1026 = vadd.f32 %v979, 1.0
          %v1027 = vadd.f32 %v981, 1.0
          %v1028 = vadd.f32 %v983, 1.0
          %v1029 = vadd.f32 %v985, 1.0
          %v1030 = vadd.f32 %v987, 1.0
          %v1031 = vadd.f32 %v989, 1.0
          %v1032 = vadd.f32 %v991, 1.0
          %v1033 = vadd.f32 %v993, 1.0
          %v1034 = vadd.f32 %v995, 1.0
          %v1035 = vadd.f32 %v997, 1.0
          %v1036 = vadd.f32 %v999, 1.0
          %v1037 = vadd.f32 %v1001, 1.0
          %v1038 = vadd.f32 %v1003, 1.0
          %v1039 = vadd.f32 %v1005, 1.0
          %v1040 = vadd.f32 %v1007, 1.0
          %v1041 = vadd.f32 %v1009, 1.0
          %v1042 = vrcp.pop %v1010
          %v1043 = vmul.f32 1.0, %v1042
          %v1044 = vrcp.pop %v1011
          %v1045 = vmul.f32 1.0, %v1044
          %v1046 = vrcp.pop %v1012
          %v1047 = vmul.f32 1.0, %v1046
          %v1048 = vrcp.pop %v1013
          %v1049 = vmul.f32 1.0, %v1048
          %v1050 = vrcp.pop %v1014
          %v1051 = vmul.f32 1.0, %v1050
          %v1052 = vrcp.pop %v1015
          %v1053 = vmul.f32 1.0, %v1052
          %v1054 = vrcp.pop %v1016
          %v1055 = vmul.f32 1.0, %v1054
          %v1056 = vrcp.pop %v1017
          %v1057 = vmul.f32 1.0, %v1056
          %v1058 = vrcp.pop %v1018
          %v1059 = vmul.f32 1.0, %v1058
          %v1060 = vrcp.pop %v1019
          %v1061 = vmul.f32 1.0, %v1060
          %v1062 = vrcp.pop %v1020
          %v1063 = vmul.f32 1.0, %v1062
          %v1064 = vrcp.pop %v1021
          %v1065 = vmul.f32 1.0, %v1064
          %v1066 = vrcp.pop %v1022
          %v1067 = vmul.f32 1.0, %v1066
          %v1068 = vrcp.pop %v1023
          %v1069 = vmul.f32 1.0, %v1068
          %v1070 = vrcp.pop %v1024
          %v1071 = vmul.f32 1.0, %v1070
          %v1072 = vrcp.pop %v1025
          %v1073 = vmul.f32 1.0, %v1072
          %v1074 = vrcp.pop %v1026
          %v1075 = vmul.f32 1.0, %v1074
          %v1076 = vrcp.pop %v1027
          %v1077 = vmul.f32 1.0, %v1076
          %v1078 = vrcp.pop %v1028
          %v1079 = vmul.f32 1.0, %v1078
          %v1080 = vrcp.pop %v1029
          %v1081 = vmul.f32 1.0, %v1080
          %v1082 = vrcp.pop %v1030
          %v1083 = vmul.f32 1.0, %v1082
          %v1084 = vrcp.pop %v1031
          %v1085 = vmul.f32 1.0, %v1084
          %v1086 = vrcp.pop %v1032
          %v1087 = vmul.f32 1.0, %v1086
          %v1088 = vrcp.pop %v1033
          %v1089 = vmul.f32 1.0, %v1088
          %v1090 = vrcp.pop %v1034
          %v1091 = vmul.f32 1.0, %v1090
          %v1092 = vrcp.pop %v1035
          %v1093 = vmul.f32 1.0, %v1092
          %v1094 = vrcp.pop %v1036
          %v1095 = vmul.f32 1.0, %v1094
          %v1096 = vrcp.pop %v1037
          %v1097 = vmul.f32 1.0, %v1096
          %v1098 = vrcp.pop %v1038
          %v1099 = vmul.f32 1.0, %v1098
          %v1100 = vrcp.pop %v1039
          %v1101 = vmul.f32 1.0, %v1100
          %v1102 = vrcp.pop %v1040
          %v1103 = vmul.f32 1.0, %v1102
          %v1104 = vrcp.pop %v1041
          %v1105 = vmul.f32 1.0, %v1104
          %v1106 = vmul.f32 %v882, %v1043
          %v1107 = vmul.f32 %v883, %v1045
          %v1108 = vmul.f32 %v884, %v1047
          %v1109 = vmul.f32 %v885, %v1049
          %v1110 = vmul.f32 %v886, %v1051
          %v1111 = vmul.f32 %v887, %v1053
          %v1112 = vmul.f32 %v888, %v1055
          %v1113 = vmul.f32 %v889, %v1057
          %v1114 = vmul.f32 %v890, %v1059
          %v1115 = vmul.f32 %v891, %v1061
          %v1116 = vmul.f32 %v892, %v1063
          %v1117 = vmul.f32 %v893, %v1065
          %v1118 = vmul.f32 %v894, %v1067
          %v1119 = vmul.f32 %v895, %v1069
          %v1120 = vmul.f32 %v896, %v1071
          %v1121 = vmul.f32 %v897, %v1073
          %v1122 = vmul.f32 %v898, %v1075
          %v1123 = vmul.f32 %v899, %v1077
          %v1124 = vmul.f32 %v900, %v1079
          %v1125 = vmul.f32 %v901, %v1081
          %v1126 = vmul.f32 %v902, %v1083
          %v1127 = vmul.f32 %v903, %v1085
          %v1128 = vmul.f32 %v904, %v1087
          %v1129 = vmul.f32 %v905, %v1089
          %v1130 = vmul.f32 %v906, %v1091
          %v1131 = vmul.f32 %v907, %v1093
          %v1132 = vmul.f32 %v908, %v1095
          %v1133 = vmul.f32 %v909, %v1097
          %v1134 = vmul.f32 %v910, %v1099
          %v1135 = vmul.f32 %v911, %v1101
          %v1136 = vmul.f32 %v912, %v1103
          %v1137 = vmul.f32 %v913, %v1105
          %v1138 = vpack.c.bf16 %v1107, %v1106
          %v1139 = vpack.c.bf16 %v1109, %v1108
          %v1140 = vpack.c.bf16 %v1111, %v1110
          %v1141 = vpack.c.bf16 %v1113, %v1112
          %v1142 = vpack.c.bf16 %v1115, %v1114
          %v1143 = vpack.c.bf16 %v1117, %v1116
          %v1144 = vpack.c.bf16 %v1119, %v1118
          %v1145 = vpack.c.bf16 %v1121, %v1120
          %v1146 = vpack.c.bf16 %v1123, %v1122
          %v1147 = vpack.c.bf16 %v1125, %v1124
          %v1148 = vpack.c.bf16 %v1127, %v1126
          %v1149 = vpack.c.bf16 %v1129, %v1128
          %v1150 = vpack.c.bf16 %v1131, %v1130
          %v1151 = vpack.c.bf16 %v1133, %v1132
          %v1152 = vpack.c.bf16 %v1135, %v1134
          %v1153 = vpack.c.bf16 %v1137, %v1136
          %v1170 = vunpack.c.l.b16 %v1138
          %v1171 = vunpack.c.h.b16 %v1138
          %v1172 = vunpack.c.l.b16 %v1139
          %v1173 = vunpack.c.h.b16 %v1139
          %v1174 = vunpack.c.l.b16 %v1140
          %v1175 = vunpack.c.h.b16 %v1140
          %v1176 = vunpack.c.l.b16 %v1141
          %v1177 = vunpack.c.h.b16 %v1141
          %v1178 = vunpack.c.l.b16 %v1142
          %v1179 = vunpack.c.h.b16 %v1142
          %v1180 = vunpack.c.l.b16 %v1143
          %v1181 = vunpack.c.h.b16 %v1143
          %v1182 = vunpack.c.l.b16 %v1144
          %v1183 = vunpack.c.h.b16 %v1144
          %v1184 = vunpack.c.l.b16 %v1145
          %v1185 = vunpack.c.h.b16 %v1145
          %v1186 = vunpack.c.l.b16 %v1146
          %v1187 = vunpack.c.h.b16 %v1146
          %v1188 = vunpack.c.l.b16 %v1147
          %v1189 = vunpack.c.h.b16 %v1147
          %v1190 = vunpack.c.l.b16 %v1148
          %v1191 = vunpack.c.h.b16 %v1148
          %v1192 = vunpack.c.l.b16 %v1149
          %v1193 = vunpack.c.h.b16 %v1149
          %v1194 = vunpack.c.l.b16 %v1150
          %v1195 = vunpack.c.h.b16 %v1150
          %v1196 = vunpack.c.l.b16 %v1151
          %v1197 = vunpack.c.h.b16 %v1151
          %v1198 = vunpack.c.l.b16 %v1152
          %v1199 = vunpack.c.h.b16 %v1152
          %v1200 = vunpack.c.l.b16 %v1153
          %v1201 = vunpack.c.h.b16 %v1153
          %v1202 = vpack.c.b16 %v1170, %v1170
          %v1203 = vpack.c.b16 %v1171, %v1171
          %v1204 = vpack.c.b16 %v1172, %v1172
          %v1205 = vpack.c.b16 %v1173, %v1173
          %v1206 = vpack.c.b16 %v1174, %v1174
          %v1207 = vpack.c.b16 %v1175, %v1175
          %v1208 = vpack.c.b16 %v1176, %v1176
          %v1209 = vpack.c.b16 %v1177, %v1177
          %v1210 = vpack.c.b16 %v1178, %v1178
          %v1211 = vpack.c.b16 %v1179, %v1179
          %v1212 = vpack.c.b16 %v1180, %v1180
          %v1213 = vpack.c.b16 %v1181, %v1181
          %v1214 = vpack.c.b16 %v1182, %v1182
          %v1215 = vpack.c.b16 %v1183, %v1183
          %v1216 = vpack.c.b16 %v1184, %v1184
          %v1217 = vpack.c.b16 %v1185, %v1185
          %v1218 = vpack.c.b16 %v1186, %v1186
          %v1219 = vpack.c.b16 %v1187, %v1187
          %v1220 = vpack.c.b16 %v1188, %v1188
          %v1221 = vpack.c.b16 %v1189, %v1189
          %v1222 = vpack.c.b16 %v1190, %v1190
          %v1223 = vpack.c.b16 %v1191, %v1191
          %v1224 = vpack.c.b16 %v1192, %v1192
          %v1225 = vpack.c.b16 %v1193, %v1193
          %v1226 = vpack.c.b16 %v1194, %v1194
          %v1227 = vpack.c.b16 %v1195, %v1195
          %v1228 = vpack.c.b16 %v1196, %v1196
          %v1229 = vpack.c.b16 %v1197, %v1197
          %v1230 = vpack.c.b16 %v1198, %v1198
          %v1231 = vpack.c.b16 %v1199, %v1199
          %v1232 = vpack.c.b16 %v1200, %v1200
          %v1233 = vpack.c.b16 %v1201, %v1201
          %1266 = vst [vmem:[%s285] sm:$0xf] %v1202
          %1267 = vst [vmem:[%s285 + $0x4] sm:$0xf] %v1203
          %1268 = vst [vmem:[%s285 + $0x8] sm:$0xf] %v1204
          %1269 = vst [vmem:[%s285 + $0xc] sm:$0xf] %v1205
          %1270 = vst [vmem:[%s285 + $0x10] sm:$0xf] %v1206
          %1271 = vst [vmem:[%s285 + $0x14] sm:$0xf] %v1207
          %1272 = vst [vmem:[%s285 + $0x18] sm:$0xf] %v1208
          %1273 = vst [vmem:[%s285 + $0x1c] sm:$0xf] %v1209
          %1274 = vst [vmem:[%s285 + $0x20] sm:$0xf] %v1210
          %1275 = vst [vmem:[%s285 + $0x24] sm:$0xf] %v1211
          %1276 = vst [vmem:[%s285 + $0x28] sm:$0xf] %v1212
          %1277 = vst [vmem:[%s285 + $0x2c] sm:$0xf] %v1213
          %1278 = vst [vmem:[%s285 + $0x30] sm:$0xf] %v1214
          %1279 = vst [vmem:[%s285 + $0x34] sm:$0xf] %v1215
          %1280 = vst [vmem:[%s285 + $0x38] sm:$0xf] %v1216
          %1281 = vst [vmem:[%s285 + $0x3c] sm:$0xf] %v1217
          %1282 = vst [vmem:[%s285 + $0x40] sm:$0xf] %v1218
          %1283 = vst [vmem:[%s285 + $0x44] sm:$0xf] %v1219
          %1284 = vst [vmem:[%s285 + $0x48] sm:$0xf] %v1220
          %1285 = vst [vmem:[%s285 + $0x4c] sm:$0xf] %v1221
          %1286 = vst [vmem:[%s285 + $0x50] sm:$0xf] %v1222
          %1287 = vst [vmem:[%s285 + $0x54] sm:$0xf] %v1223
          %1288 = vst [vmem:[%s285 + $0x58] sm:$0xf] %v1224
          %1289 = vst [vmem:[%s285 + $0x5c] sm:$0xf] %v1225
          %1290 = vst [vmem:[%s285 + $0x60] sm:$0xf] %v1226
          %1291 = vst [vmem:[%s285 + $0x64] sm:$0xf] %v1227
          %1292 = vst [vmem:[%s285 + $0x68] sm:$0xf] %v1228
          %1293 = vst [vmem:[%s285 + $0x6c] sm:$0xf] %v1229
          %1294 = vst [vmem:[%s285 + $0x70] sm:$0xf] %v1230
          %1295 = vst [vmem:[%s285 + $0x74] sm:$0xf] %v1231
          %1296 = vst [vmem:[%s285 + $0x78] sm:$0xf] %v1232
          %1297 = vst [vmem:[%s285 + $0x7c] sm:$0xf] %v1233
        $region44: #{_stem_jit.1} parent=35 // pred_fallthru
          _
        %s1298 = sand.u32 %s166, 1
        %s1299 = scalar_lea.sflag [#allocation4], %s1298
        %s1300 = sand.u32 %s166, 1
        %s1301 = smul.addr %s1300, 128
        %s1302 = scalar_lea.vmem [#allocation3], %s1301
        // Predicated region
        $region45: #{_stem_jit.1} parent=35 // pred_check
          %p1303 = pneg %p176
        $region46: #{_stem_jit.1} parent=35 // pred_check_branch
          %1305 = sbr.rel (%p1303) target = $region48
        $region47: #{_stem_jit.1} parent=35 // pred_region
          %s1306 = smul.u32 32, %s25
          %s1308 = ssub.s32 2048, 2048
          %1309 = vsyncadd %s1299, %s1308
          %s1310 = sadd.s32 %s26, %s1306
          %s1311 = smul.addr %s24, 32
          %s1312 = sadd.s32 %s1310, %s1311
          %s1313 = smul.addr %s1312, 64
          %s1314 = scalar_lea.hbm %s4, %s1313
          %s1315 = sshll.u32 %s1302, 4
          %s1316 = int_to_ptr.vmem [resolvable:$true] %s1315
          %1321 = dma.vmem_to_hbm [thread:$0]  %s1316, 2048, %s1314, %s1299, 64, 64, 4
        $region48: #{_stem_jit.1} parent=35 // pred_fallthru
          _
      $region36: #{_stem_jit.1} parent=5 // pred_fallthru
        _
      %p1322 = scmp.le.s32.totalorder 2, %s13
      // Predicated region
      $region49: #{_stem_jit.1} parent=5 // pred_check
        %p1323 = pneg %p1322
      $region50: #{_stem_jit.1} parent=5 // pred_check_branch
        %1325 = sbr.rel (%p1323) target = $region52
      $region51: #{_stem_jit.1} parent=5 // pred_region
        %s1326 = ssub.s32 %s13, 2
        // Predicated region
        $region53: #{_stem_jit.1} parent=51 // pred_check
          %p1327 = pneg %p182
        $region54: #{_stem_jit.1} parent=51 // pred_check_branch
          %1329 = sbr.rel (%p1327) target = $region56
        $region55: #{_stem_jit.1} parent=51 // pred_region
          %s1330 = sand.u32 %s167, 1
          %s1331 = scalar_lea.sflag [#allocation4], %s1330
          %s1332 = sand.u32 %s167, 1
          %s1333 = smul.addr %s1332, 128
          %s1334 = scalar_lea.vmem [#allocation3], %s1333
          %1335 = dma.done %s1331, 2048
        $region56: #{_stem_jit.1} parent=51 // pred_fallthru
          _
      $region52: #{_stem_jit.1} parent=5 // pred_fallthru
        _
    $region6: #{_stem_jit.1} parent=1 // loop_footer
      %s17 = sadd.s32 1, %s13
    $region7: #{_stem_jit.1} parent=1 // loop_footer_branch
      %12 = sbr.rel target = $region3
    $region8: #{_stem_jit.1} parent=1 // loop_exit
      _
    %1336 = vsyncpa [#allocation4], 1
    %s1337 = scalar_lea.sflag [#allocation4], 1
    %1338 = vsyncpa %s1337, 1

</llo_original>
